<compile_context>
chip_gen: v7x
topology: tpu7x:2x2x1
jax: 0.10.0
libtpu: 0.0.40
codegen_flags: <defaults>
</compile_context>

<pallas_src>
import functools

import jax
import jax.numpy as jnp
from jax.experimental import pallas as pl
from jax.experimental.pallas import tpu as pltpu

_LANES = 128


def _shift_h(x, dy):
    """result[n, h, w, c] = x[n, h+dy, w, c], zero-filled. H is a major
    (untiled) axis, so these slices/concats are free vreg placement."""
    N, H, W, C = x.shape
    zrow = jnp.zeros((N, 1, W, C), x.dtype)
    if dy == 1:
        return jnp.concatenate([x[:, 1:, :, :], zrow], axis=1)
    if dy == -1:
        return jnp.concatenate([zrow, x[:, :H - 1, :, :]], axis=1)
    return x


def _shift_w(x, dx):
    """result[n, h, w, c] = x[n, h, w+dx, c], zero-filled. W is the sublane
    axis: extend with an 8-wide (tile-aligned) zero strip, then take a
    statically-shifted slice (single VMEM-local relayout, no lane movement)."""
    N, H, W, C = x.shape
    zcols = jnp.zeros((N, H, 8, C), x.dtype)
    if dx == 1:      # want x[w+1], zero at w = W-1
        ext = jnp.concatenate([x, zcols], axis=2)
        return ext[:, :, 1:1 + W, :]
    if dx == -1:     # want x[w-1], zero at w = 0
        ext = jnp.concatenate([zcols, x], axis=2)
        return ext[:, :, 7:7 + W, :]
    return x


def _frelu_kernel(x_ref, w_ref, gamma_ref, beta_ref, o_ref, *, eps):
    x = x_ref[...].astype(jnp.float32)      # (N, H, W, Cb), channels on lanes
    wt = w_ref[...].astype(jnp.float32)     # (3, 3, Cb) taps, lane-aligned

    # Depthwise 3x3 conv, decomposed (channel weights commute with shifts):
    #   t_kx[h, w] = sum_ky w[ky, kx] * x[h+ky-1, w]     (H shifts, major axis)
    #   conv[h, w] = sum_kx t_kx[h, w+kx-1]              (W shifts, sublane axis)
    x_hm = _shift_h(x, -1)      # x[h-1]
    x_hp = _shift_h(x, 1)       # x[h+1]
    t = []
    for kx in range(3):
        t.append(wt[0:1, kx:kx + 1, :] * x_hm
                 + wt[1:2, kx:kx + 1, :] * x
                 + wt[2:3, kx:kx + 1, :] * x_hp)
    conv = _shift_w(t[0], -1) + t[1] + _shift_w(t[2], 1)
    # Conv bias intentionally omitted: exactly cancelled by the BN mean below.

    # BatchNorm2d (training mode): per-channel batch stats over (N, H, W).
    mean = jnp.mean(conv, axis=(0, 1, 2), keepdims=True)               # (1,1,1,Cb)
    centered = conv - mean
    var = jnp.mean(centered * centered, axis=(0, 1, 2), keepdims=True)  # biased
    scale = jax.lax.rsqrt(var + eps) * gamma_ref[...]
    tx = centered * scale + beta_ref[...]

    o_ref[...] = jnp.maximum(x, tx).astype(o_ref.dtype)


def frelu_pallas(x, w, b, gamma, beta, eps=1e-5, block_c=_LANES):
    """FReLU forward.

    x: (N, C, H, W); w: (C, 1, 3, 3) depthwise conv weight; b: (C,) conv bias
    (not sent to the kernel: a per-channel constant is exactly cancelled by
    training-mode BatchNorm's mean subtraction); gamma, beta: (C,) BN affine.
    """
    del b  # mathematically a no-op under training-mode BN
    assert block_c % _LANES == 0
    N, C, H, W = x.shape
    Cp = pl.cdiv(C, block_c) * block_c

    # Glue: channels-last + pad C onto full 128-wide lanes; taps as (3, 3, C).
    x_cl = jnp.pad(jnp.transpose(x, (0, 2, 3, 1)),
                   ((0, 0), (0, 0), (0, 0), (0, Cp - C)))
    w_cl = jnp.pad(jnp.transpose(w.reshape(C, 3, 3), (1, 2, 0)),
                   ((0, 0), (0, 0), (0, Cp - C))).astype(jnp.float32)
    g_cl = jnp.pad(gamma.reshape(1, C), ((0, 0), (0, Cp - C))).astype(jnp.float32)
    be_cl = jnp.pad(beta.reshape(1, C), ((0, 0), (0, Cp - C))).astype(jnp.float32)

    kernel = functools.partial(_frelu_kernel, eps=eps)
    out_cl = pl.pallas_call(
        kernel,
        out_shape=jax.ShapeDtypeStruct((N, H, W, Cp), x.dtype),
        grid=(Cp // block_c,),                       # channel blocks; BN is per-channel
        in_specs=[
            pl.BlockSpec((N, H, W, block_c), lambda c: (0, 0, 0, c)),
            pl.BlockSpec((3, 3, block_c), lambda c: (0, 0, c)),
            pl.BlockSpec((1, block_c), lambda c: (0, c)),
            pl.BlockSpec((1, block_c), lambda c: (0, c)),
        ],
        out_specs=pl.BlockSpec((N, H, W, block_c), lambda c: (0, 0, 0, c)),
        compiler_params=pltpu.CompilerParams(
            dimension_semantics=("parallel",),       # megacore on v7x
            vmem_limit_bytes=32 * 1024 * 1024,
        ),
    )(x_cl, w_cl, g_cl, be_cl)

    # Back to NCHW, dropping the lane padding.
    return jnp.transpose(out_cl[..., :C], (0, 3, 1, 2))


def frelu_ref(x, w, b, gamma, beta, eps=1e-5):
    """Pure-JAX reference (matches PyTorch FReLU.forward in training mode)."""
    N, C, H, W = x.shape
    dn = jax.lax.conv_dimension_numbers(x.shape, w.shape,
                                        ("NCHW", "OIHW", "NCHW"))
    conv = jax.lax.conv_general_dilated(
        x, w, window_strides=(1, 1), padding=((1, 1), (1, 1)),
        dimension_numbers=dn, feature_group_count=C)
    conv = conv + b.reshape(1, C, 1, 1)
    mean = conv.mean(axis=(0, 2, 3), keepdims=True)
    var = ((conv - mean) ** 2).mean(axis=(0, 2, 3), keepdims=True)
    tx = (conv - mean) / jnp.sqrt(var + eps) * gamma.reshape(1, C, 1, 1) \
        + beta.reshape(1, C, 1, 1)
    return jnp.maximum(x, tx)


if __name__ == "__main__":
    N, C, H, W = 2, 4, 16, 16
    key = jax.random.PRNGKey(0)
    kx, kw, kb, kg, kbt = jax.random.split(key, 5)

    x = jax.random.normal(kx, (N, C, H, W), dtype=jnp.float32)
    w = jax.random.normal(kw, (C, 1, 3, 3), dtype=jnp.float32) * 0.2
    b = jax.random.normal(kb, (C,), dtype=jnp.float32) * 0.1
    gamma = jnp.ones((C,), jnp.float32) + 0.1 * jax.random.normal(kg, (C,))
    beta = 0.1 * jax.random.normal(kbt, (C,), dtype=jnp.float32)

    out = jax.block_until_ready(frelu_pallas(x, w, b, gamma, beta))
    ref = frelu_ref(x, w, b, gamma, beta)

    assert out.shape == (N, C, H, W) and out.dtype == x.dtype
    assert jnp.allclose(out, ref, rtol=1e-5, atol=1e-5), \
        f"max abs err {jnp.max(jnp.abs(out - ref))}"
    print("KERNEL_OK")
</pallas_src>

<mosaic_0001>
module attributes {stable_mosaic.version = 11 : i64} {
  func.func @_frelu_kernel(%arg0: i32, %arg1: memref<2x16x16x128xf32, #tpu.memory_space<vmem>>, %arg2: memref<3x3x128xf32, #tpu.memory_space<vmem>>, %arg3: memref<1x128xf32, #tpu.memory_space<vmem>>, %arg4: memref<1x128xf32, #tpu.memory_space<vmem>>, %arg5: memref<2x16x16x128xf32, #tpu.memory_space<vmem>>) attributes {dimension_semantics = [#tpu.dimension_semantics<parallel>], iteration_bounds = array<i64: 1>, scalar_prefetch = 0 : i64, scratch_operands = 0 : i64, tpu.core_type = #tpu.core_type<tc>, window_params = [{transform_indices = @transform_0, window_bounds = array<i64: 2, 16, 16, 128>}, {transform_indices = @transform_1, window_bounds = array<i64: 3, 3, 128>}, {transform_indices = @transform_2, window_bounds = array<i64: 1, 128>}, {transform_indices = @transform_3, window_bounds = array<i64: 1, 128>}, {transform_indices = @transform_4, window_bounds = array<i64: 2, 16, 16, 128>}]} {
    %c0 = arith.constant 0 : index
    %c0_0 = arith.constant 0 : index
    %c0_1 = arith.constant 0 : index
    %c0_2 = arith.constant 0 : index
    %0 = vector.load %arg1[%c0, %c0_0, %c0_1, %c0_2] : memref<2x16x16x128xf32, #tpu.memory_space<vmem>>, vector<2x16x16x128xf32>
    %c0_3 = arith.constant 0 : index
    %c0_4 = arith.constant 0 : index
    %c0_5 = arith.constant 0 : index
    %1 = vector.load %arg2[%c0_3, %c0_4, %c0_5] : memref<3x3x128xf32, #tpu.memory_space<vmem>>, vector<3x3x128xf32>
    %cst = arith.constant 0.000000e+00 : f32
    %2 = vector.broadcast %cst : f32 to vector<2x1x16x128xf32>
    %3 = vector.extract_strided_slice %0 {offsets = [0, 0, 0, 0], sizes = [2, 15, 16, 128], strides = [1, 1, 1, 1]} : vector<2x16x16x128xf32> to vector<2x15x16x128xf32>
    %4 = tpu.concatenate %2, %3 in 1 : vector<2x1x16x128xf32>, vector<2x15x16x128xf32> -> vector<2x16x16x128xf32>
    %cst_6 = arith.constant 0.000000e+00 : f32
    %5 = vector.broadcast %cst_6 : f32 to vector<2x1x16x128xf32>
    %6 = vector.extract_strided_slice %0 {offsets = [0, 1, 0, 0], sizes = [2, 15, 16, 128], strides = [1, 1, 1, 1]} : vector<2x16x16x128xf32> to vector<2x15x16x128xf32>
    %7 = tpu.concatenate %6, %5 in 1 : vector<2x15x16x128xf32>, vector<2x1x16x128xf32> -> vector<2x16x16x128xf32>
    %8 = vector.extract_strided_slice %1 {offsets = [0, 0, 0], sizes = [1, 1, 128], strides = [1, 1, 1]} : vector<3x3x128xf32> to vector<1x1x128xf32>
    %9 = vector.shape_cast %8 : vector<1x1x128xf32> to vector<1x1x1x128xf32>
    %10 = vector.broadcast %9 : vector<1x1x1x128xf32> to vector<2x16x16x128xf32>
    %11 = arith.mulf %10, %4 : vector<2x16x16x128xf32>
    %12 = vector.extract_strided_slice %1 {offsets = [1, 0, 0], sizes = [1, 1, 128], strides = [1, 1, 1]} : vector<3x3x128xf32> to vector<1x1x128xf32>
    %13 = vector.shape_cast %12 : vector<1x1x128xf32> to vector<1x1x1x128xf32>
    %14 = vector.broadcast %13 : vector<1x1x1x128xf32> to vector<2x16x16x128xf32>
    %15 = arith.mulf %14, %0 : vector<2x16x16x128xf32>
    %16 = arith.addf %11, %15 : vector<2x16x16x128xf32>
    %17 = vector.extract_strided_slice %1 {offsets = [2, 0, 0], sizes = [1, 1, 128], strides = [1, 1, 1]} : vector<3x3x128xf32> to vector<1x1x128xf32>
    %18 = vector.shape_cast %17 : vector<1x1x128xf32> to vector<1x1x1x128xf32>
    %19 = vector.broadcast %18 : vector<1x1x1x128xf32> to vector<2x16x16x128xf32>
    %20 = arith.mulf %19, %7 : vector<2x16x16x128xf32>
    %21 = arith.addf %16, %20 : vector<2x16x16x128xf32>
    %22 = vector.extract_strided_slice %1 {offsets = [0, 1, 0], sizes = [1, 1, 128], strides = [1, 1, 1]} : vector<3x3x128xf32> to vector<1x1x128xf32>
    %23 = vector.shape_cast %22 : vector<1x1x128xf32> to vector<1x1x1x128xf32>
    %24 = vector.broadcast %23 : vector<1x1x1x128xf32> to vector<2x16x16x128xf32>
    %25 = arith.mulf %24, %4 : vector<2x16x16x128xf32>
    %26 = vector.extract_strided_slice %1 {offsets = [1, 1, 0], sizes = [1, 1, 128], strides = [1, 1, 1]} : vector<3x3x128xf32> to vector<1x1x128xf32>
    %27 = vector.shape_cast %26 : vector<1x1x128xf32> to vector<1x1x1x128xf32>
    %28 = vector.broadcast %27 : vector<1x1x1x128xf32> to vector<2x16x16x128xf32>
    %29 = arith.mulf %28, %0 : vector<2x16x16x128xf32>
    %30 = arith.addf %25, %29 : vector<2x16x16x128xf32>
    %31 = vector.extract_strided_slice %1 {offsets = [2, 1, 0], sizes = [1, 1, 128], strides = [1, 1, 1]} : vector<3x3x128xf32> to vector<1x1x128xf32>
    %32 = vector.shape_cast %31 : vector<1x1x128xf32> to vector<1x1x1x128xf32>
    %33 = vector.broadcast %32 : vector<1x1x1x128xf32> to vector<2x16x16x128xf32>
    %34 = arith.mulf %33, %7 : vector<2x16x16x128xf32>
    %35 = arith.addf %30, %34 : vector<2x16x16x128xf32>
    %36 = vector.extract_strided_slice %1 {offsets = [0, 2, 0], sizes = [1, 1, 128], strides = [1, 1, 1]} : vector<3x3x128xf32> to vector<1x1x128xf32>
    %37 = vector.shape_cast %36 : vector<1x1x128xf32> to vector<1x1x1x128xf32>
    %38 = vector.broadcast %37 : vector<1x1x1x128xf32> to vector<2x16x16x128xf32>
    %39 = arith.mulf %38, %4 : vector<2x16x16x128xf32>
    %40 = vector.extract_strided_slice %1 {offsets = [1, 2, 0], sizes = [1, 1, 128], strides = [1, 1, 1]} : vector<3x3x128xf32> to vector<1x1x128xf32>
    %41 = vector.shape_cast %40 : vector<1x1x128xf32> to vector<1x1x1x128xf32>
    %42 = vector.broadcast %41 : vector<1x1x1x128xf32> to vector<2x16x16x128xf32>
    %43 = arith.mulf %42, %0 : vector<2x16x16x128xf32>
    %44 = arith.addf %39, %43 : vector<2x16x16x128xf32>
    %45 = vector.extract_strided_slice %1 {offsets = [2, 2, 0], sizes = [1, 1, 128], strides = [1, 1, 1]} : vector<3x3x128xf32> to vector<1x1x128xf32>
    %46 = vector.shape_cast %45 : vector<1x1x128xf32> to vector<1x1x1x128xf32>
    %47 = vector.broadcast %46 : vector<1x1x1x128xf32> to vector<2x16x16x128xf32>
    %48 = arith.mulf %47, %7 : vector<2x16x16x128xf32>
    %49 = arith.addf %44, %48 : vector<2x16x16x128xf32>
    %cst_7 = arith.constant 0.000000e+00 : f32
    %50 = vector.broadcast %cst_7 : f32 to vector<2x16x8x128xf32>
    %51 = tpu.concatenate %50, %21 in 2 : vector<2x16x8x128xf32>, vector<2x16x16x128xf32> -> vector<2x16x24x128xf32>
    %52 = vector.extract_strided_slice %51 {offsets = [0, 0, 7, 0], sizes = [2, 16, 16, 128], strides = [1, 1, 1, 1]} : vector<2x16x24x128xf32> to vector<2x16x16x128xf32>
    %53 = arith.addf %52, %35 : vector<2x16x16x128xf32>
    %cst_8 = arith.constant 0.000000e+00 : f32
    %54 = vector.broadcast %cst_8 : f32 to vector<2x16x8x128xf32>
    %55 = tpu.concatenate %49, %54 in 2 : vector<2x16x16x128xf32>, vector<2x16x8x128xf32> -> vector<2x16x24x128xf32>
    %56 = vector.extract_strided_slice %55 {offsets = [0, 0, 1, 0], sizes = [2, 16, 16, 128], strides = [1, 1, 1, 1]} : vector<2x16x24x128xf32> to vector<2x16x16x128xf32>
    %57 = arith.addf %53, %56 : vector<2x16x16x128xf32>
    %cst_9 = arith.constant dense<0.000000e+00> : vector<128xf32>
    %58 = vector.multi_reduction <add>, %57, %cst_9 [0, 1, 2] : vector<2x16x16x128xf32> to vector<128xf32>
    %59 = vector.shape_cast %58 : vector<128xf32> to vector<1x1x1x128xf32>
    %cst_10 = arith.constant 5.120000e+02 : f32
    %60 = vector.broadcast %cst_10 : f32 to vector<1x1x1x128xf32>
    %61 = arith.divf %59, %60 : vector<1x1x1x128xf32>
    %62 = vector.broadcast %61 : vector<1x1x1x128xf32> to vector<2x16x16x128xf32>
    %63 = arith.subf %57, %62 : vector<2x16x16x128xf32>
    %64 = arith.mulf %63, %63 : vector<2x16x16x128xf32>
    %cst_11 = arith.constant dense<0.000000e+00> : vector<128xf32>
    %65 = vector.multi_reduction <add>, %64, %cst_11 [0, 1, 2] : vector<2x16x16x128xf32> to vector<128xf32>
    %66 = vector.shape_cast %65 : vector<128xf32> to vector<1x1x1x128xf32>
    %cst_12 = arith.constant 5.120000e+02 : f32
    %67 = vector.broadcast %cst_12 : f32 to vector<1x1x1x128xf32>
    %68 = arith.divf %66, %67 : vector<1x1x1x128xf32>
    %cst_13 = arith.constant 9.99999974E-6 : f32
    %69 = vector.broadcast %cst_13 : f32 to vector<1x1x1x128xf32>
    %70 = arith.addf %68, %69 : vector<1x1x1x128xf32>
    %71 = math.rsqrt %70 : vector<1x1x1x128xf32>
    %c0_14 = arith.constant 0 : index
    %c0_15 = arith.constant 0 : index
    %72 = vector.load %arg3[%c0_14, %c0_15] : memref<1x128xf32, #tpu.memory_space<vmem>>, vector<1x128xf32>
    %73 = vector.shape_cast %72 : vector<1x128xf32> to vector<1x1x1x128xf32>
    %74 = arith.mulf %71, %73 : vector<1x1x1x128xf32>
    %75 = vector.broadcast %74 : vector<1x1x1x128xf32> to vector<2x16x16x128xf32>
    %76 = arith.mulf %63, %75 : vector<2x16x16x128xf32>
    %c0_16 = arith.constant 0 : index
    %c0_17 = arith.constant 0 : index
    %77 = vector.load %arg4[%c0_16, %c0_17] : memref<1x128xf32, #tpu.memory_space<vmem>>, vector<1x128xf32>
    %78 = vector.shape_cast %77 : vector<1x128xf32> to vector<1x1x1x128xf32>
    %79 = vector.broadcast %78 : vector<1x1x1x128xf32> to vector<2x16x16x128xf32>
    %80 = arith.addf %76, %79 : vector<2x16x16x128xf32>
    %81 = arith.maximumf %0, %80 : vector<2x16x16x128xf32>
    %c0_18 = arith.constant 0 : index
    %c0_19 = arith.constant 0 : index
    %c0_20 = arith.constant 0 : index
    %c0_21 = arith.constant 0 : index
    %82 = vector.load %arg5[%c0_18, %c0_19, %c0_20, %c0_21] : memref<2x16x16x128xf32, #tpu.memory_space<vmem>>, vector<2x16x16x128xf32>
    tpu.vector_store %arg5[%c0_18, %c0_19, %c0_20, %c0_21], %81 {strides = array<i32>} : memref<2x16x16x128xf32, #tpu.memory_space<vmem>>, vector<2x16x16x128xf32>,
    return
  }
  func.func @transform_0(%arg0: i32) -> (i32, i32, i32, i32) {
    %c0_i32 = arith.constant 0 : i32
    %c0_i32_0 = arith.constant 0 : i32
    %c0_i32_1 = arith.constant 0 : i32
    %c0_i32_2 = arith.constant 0 : i32
    return %c0_i32, %c0_i32_0, %c0_i32_1, %arg0 : i32, i32, i32, i32
  }
  func.func @transform_1(%arg0: i32) -> (i32, i32, i32) {
    %c0_i32 = arith.constant 0 : i32
    %c0_i32_0 = arith.constant 0 : i32
    %c0_i32_1 = arith.constant 0 : i32
    return %c0_i32, %c0_i32_0, %arg0 : i32, i32, i32
  }
  func.func @transform_2(%arg0: i32) -> (i32, i32) {
    %c0_i32 = arith.constant 0 : i32
    %c0_i32_0 = arith.constant 0 : i32
    return %c0_i32, %arg0 : i32, i32
  }
  func.func @transform_3(%arg0: i32) -> (i32, i32) {
    %c0_i32 = arith.constant 0 : i32
    %c0_i32_0 = arith.constant 0 : i32
    return %c0_i32, %arg0 : i32, i32
  }
  func.func @transform_4(%arg0: i32) -> (i32, i32, i32, i32) {
    %c0_i32 = arith.constant 0 : i32
    %c0_i32_0 = arith.constant 0 : i32
    %c0_i32_1 = arith.constant 0 : i32
    %c0_i32_2 = arith.constant 0 : i32
    return %c0_i32, %c0_i32_0, %c0_i32_1, %arg0 : i32, i32, i32, i32
  }
}

</mosaic_0001>

<llo_original>
// kernel: tpu_custom_call.1
$region0: #{tpu_custom_call.1}
  #allocation0 [shape = 'u32[]', space=smem, size = 0x4, offset = 0x4, fixed_abs, tag = 'smem constant byte address 0x4 - core index']
  #allocation1 [shape = 'u32[144,128]{1,0:T(1,128)}', space=vmem, size = 0x12000, scoped, tag = 'internal scratch']
  %s0 = inlined_call_operand.hbm [shape: f32[2,16,16,128], index: 0, kind: input, shape index: {}]
  %s1 = inlined_call_operand.hbm [shape: f32[3,3,128], index: 1, kind: input, shape index: {}]
  %s2 = inlined_call_operand.vmem [shape: f32[1,128], index: 2, kind: input, shape index: {}]
  %s3 = inlined_call_operand.vmem [shape: f32[1,128], index: 3, kind: input, shape index: {}]
  %s4 = inlined_call_operand.hbm [shape: f32[2,16,16,128], index: 4, kind: output, shape index: {}]
  %s5 = sld [smem:[#allocation0]]
  $region34: #{tpu_custom_call.1} parent=0
    _
  %s7 = ssub.s32 1, %s5
  %s8 = scalar_select 0, %s7, %s5
  $region1: #{tpu_custom_call.1} parent=0
    #allocation2 [shape = 'u8[262144]{0}', space=vmem, size = 0x40000, scoped, tag = 'input window, operand 0, single buffered']
    #allocation3 [shape = 's32[1]{0}', space=sflag, size = 0x4, scoped, tag = 'scoped memory for tpu_custom_call.1']
    #allocation4 [shape = 's32[1]{0}', space=sflag, size = 0x4, scoped, tag = 'scoped memory for tpu_custom_call.1']
    #allocation5 [shape = 'u8[6144]{0}', space=vmem, size = 0x1800, scoped, tag = 'input window, operand 1, single buffered']
    #allocation6 [shape = 's32[1]{0}', space=sflag, size = 0x4, scoped, tag = 'scoped memory for tpu_custom_call.1']
    #allocation7 [shape = 'u8[262144]{0}', space=vmem, size = 0x40000, scoped, tag = 'output window, operand 0, single buffered']
    %9 = vsyncpa [#allocation3], 0
    %10 = vsyncpa [#allocation6], 0
    %11 = vsyncpa [#allocation4], 0
    // Predicated region
    $region2: #{tpu_custom_call.1} parent=1 // pred_check
      _
    $region3: #{tpu_custom_call.1} parent=1 // pred_check_branch
      %13 = sbr.rel (0) target = $region5
    $region4: #{tpu_custom_call.1} parent=1 // pred_region
      %s15 = ssub.s32 8192, 8192
      %16 = vsyncadd [#allocation3], %s15
      %s17 = sshll.u32 [#allocation2], 4
      %s18 = int_to_ptr.vmem [resolvable:$true] %s17
      %23 = dma.hbm_to_vmem [thread:$0]  %s0, 8192, %s18, [#allocation3], 128, 128, 8
    $region5: #{tpu_custom_call.1} parent=1 // pred_fallthru
      _
    // Predicated region
    $region6: #{tpu_custom_call.1} parent=1 // pred_check
      _
    $region7: #{tpu_custom_call.1} parent=1 // pred_check_branch
      %25 = sbr.rel (0) target = $region9
    $region8: #{tpu_custom_call.1} parent=1 // pred_region
      %s27 = ssub.s32 192, 192
      %28 = vsyncadd [#allocation6], %s27
      %s29 = sshll.u32 [#allocation5], 4
      %s30 = int_to_ptr.vmem [resolvable:$true] %s29
      %35 = dma.hbm_to_vmem [thread:$0]  %s1, 192, %s30, [#allocation6], 64, 64, 4
    $region9: #{tpu_custom_call.1} parent=1 // pred_fallthru
      _
    // Predicated region
    $region10: #{tpu_custom_call.1} parent=1 // pred_check
      _
    $region11: #{tpu_custom_call.1} parent=1 // pred_check_branch
      %37 = sbr.rel (0) target = $region13
    $region12: #{tpu_custom_call.1} parent=1 // pred_region
      _
    $region13: #{tpu_custom_call.1} parent=1 // pred_fallthru
      _
    // Predicated region
    $region14: #{tpu_custom_call.1} parent=1 // pred_check
      _
    $region15: #{tpu_custom_call.1} parent=1 // pred_check_branch
      %39 = sbr.rel (0) target = $region17
    $region16: #{tpu_custom_call.1} parent=1 // pred_region
      _
    $region17: #{tpu_custom_call.1} parent=1 // pred_fallthru
      _
    // Predicated region
    $region18: #{tpu_custom_call.1} parent=1 // pred_check
      _
    $region19: #{tpu_custom_call.1} parent=1 // pred_check_branch
      %41 = sbr.rel (0) target = $region21
    $region20: #{tpu_custom_call.1} parent=1 // pred_region
      %42 = dma.done [#allocation3], 8192
    $region21: #{tpu_custom_call.1} parent=1 // pred_fallthru
      _
    // Predicated region
    $region22: #{tpu_custom_call.1} parent=1 // pred_check
      _
    $region23: #{tpu_custom_call.1} parent=1 // pred_check_branch
      %44 = sbr.rel (0) target = $region25
    $region24: #{tpu_custom_call.1} parent=1 // pred_region
      %45 = dma.done [#allocation6], 192
    $region25: #{tpu_custom_call.1} parent=1 // pred_fallthru
      _
    %v46 = vld [vmem:[#allocation2] sm:$0xff]
    %v47 = vld [vmem:[#allocation2 + $0x8] sm:$0xff]
    %v48 = vld [vmem:[#allocation2 + $0x10] sm:$0xff]
    %v49 = vld [vmem:[#allocation2 + $0x18] sm:$0xff]
    %v50 = vld [vmem:[#allocation2 + $0x20] sm:$0xff]
    %v51 = vld [vmem:[#allocation2 + $0x28] sm:$0xff]
    %v52 = vld [vmem:[#allocation2 + $0x30] sm:$0xff]
    %v53 = vld [vmem:[#allocation2 + $0x38] sm:$0xff]
    %v54 = vld [vmem:[#allocation2 + $0x40] sm:$0xff]
    %v55 = vld [vmem:[#allocation2 + $0x48] sm:$0xff]
    %v56 = vld [vmem:[#allocation2 + $0x50] sm:$0xff]
    %v57 = vld [vmem:[#allocation2 + $0x58] sm:$0xff]
    %v58 = vld [vmem:[#allocation2 + $0x60] sm:$0xff]
    %v59 = vld [vmem:[#allocation2 + $0x68] sm:$0xff]
    %v60 = vld [vmem:[#allocation2 + $0x70] sm:$0xff]
    %v61 = vld [vmem:[#allocation2 + $0x78] sm:$0xff]
    %v62 = vld [vmem:[#allocation2 + $0x80] sm:$0xff]
    %v63 = vld [vmem:[#allocation2 + $0x88] sm:$0xff]
    %v64 = vld [vmem:[#allocation2 + $0x90] sm:$0xff]
    %v65 = vld [vmem:[#allocation2 + $0x98] sm:$0xff]
    %v66 = vld [vmem:[#allocation2 + $0xa0] sm:$0xff]
    %v67 = vld [vmem:[#allocation2 + $0xa8] sm:$0xff]
    %v68 = vld [vmem:[#allocation2 + $0xb0] sm:$0xff]
    %v69 = vld [vmem:[#allocation2 + $0xb8] sm:$0xff]
    %v70 = vld [vmem:[#allocation2 + $0xc0] sm:$0xff]
    %v71 = vld [vmem:[#allocation2 + $0xc8] sm:$0xff]
    %v72 = vld [vmem:[#allocation2 + $0xd0] sm:$0xff]
    %v73 = vld [vmem:[#allocation2 + $0xd8] sm:$0xff]
    %v74 = vld [vmem:[#allocation2 + $0xe0] sm:$0xff]
    %v75 = vld [vmem:[#allocation2 + $0xe8] sm:$0xff]
    %v76 = vld [vmem:[#allocation2 + $0xf0] sm:$0xff]
    %v77 = vld [vmem:[#allocation2 + $0xf8] sm:$0xff]
    %v78 = vld [vmem:[#allocation2 + $0x100] sm:$0xff]
    %v79 = vld [vmem:[#allocation2 + $0x108] sm:$0xff]
    %v80 = vld [vmem:[#allocation2 + $0x110] sm:$0xff]
    %v81 = vld [vmem:[#allocation2 + $0x118] sm:$0xff]
    %v82 = vld [vmem:[#allocation2 + $0x120] sm:$0xff]
    %v83 = vld [vmem:[#allocation2 + $0x128] sm:$0xff]
    %v84 = vld [vmem:[#allocation2 + $0x130] sm:$0xff]
    %v85 = vld [vmem:[#allocation2 + $0x138] sm:$0xff]
    %v86 = vld [vmem:[#allocation2 + $0x140] sm:$0xff]
    %v87 = vld [vmem:[#allocation2 + $0x148] sm:$0xff]
    %v88 = vld [vmem:[#allocation2 + $0x150] sm:$0xff]
    %v89 = vld [vmem:[#allocation2 + $0x158] sm:$0xff]
    %v90 = vld [vmem:[#allocation2 + $0x160] sm:$0xff]
    %v91 = vld [vmem:[#allocation2 + $0x168] sm:$0xff]
    %v92 = vld [vmem:[#allocation2 + $0x170] sm:$0xff]
    %v93 = vld [vmem:[#allocation2 + $0x178] sm:$0xff]
    %v94 = vld [vmem:[#allocation2 + $0x180] sm:$0xff]
    %v95 = vld [vmem:[#allocation2 + $0x188] sm:$0xff]
    %v96 = vld [vmem:[#allocation2 + $0x190] sm:$0xff]
    %v97 = vld [vmem:[#allocation2 + $0x198] sm:$0xff]
    %v98 = vld [vmem:[#allocation2 + $0x1a0] sm:$0xff]
    %v99 = vld [vmem:[#allocation2 + $0x1a8] sm:$0xff]
    %v100 = vld [vmem:[#allocation2 + $0x1b0] sm:$0xff]
    %v101 = vld [vmem:[#allocation2 + $0x1b8] sm:$0xff]
    %v102 = vld [vmem:[#allocation2 + $0x1c0] sm:$0xff]
    %v103 = vld [vmem:[#allocation2 + $0x1c8] sm:$0xff]
    %v104 = vld [vmem:[#allocation2 + $0x1d0] sm:$0xff]
    %v105 = vld [vmem:[#allocation2 + $0x1d8] sm:$0xff]
    %v106 = vld [vmem:[#allocation2 + $0x1e0] sm:$0xff]
    %v107 = vld [vmem:[#allocation2 + $0x1e8] sm:$0xff]
    %v108 = vld [vmem:[#allocation2 + $0x1f0] sm:$0xff]
    %v109 = vld [vmem:[#allocation2 + $0x1f8] sm:$0xff]
    %v110 = vld [vmem:[#allocation5] sm:$0x7]
    %v111 = vld [vmem:[#allocation5 + $0x4] sm:$0x7]
    %v112 = vld [vmem:[#allocation5 + $0x8] sm:$0x7]
    %v113 = vlaneseq
    %v114 = vshrl.u32 %v113, 7
    %v115 = vsub.s32 0, %v114
    %v116 = vrot.slane %v110, %v115
    %v117 = vmul.f32 %v116, 0.0
    %v118 = vmul.f32 %v116, %v46
    %v119 = vmul.f32 %v116, %v47
    %v120 = vmul.f32 %v116, %v48
    %v121 = vmul.f32 %v116, %v49
    %v122 = vmul.f32 %v116, %v50
    %v123 = vmul.f32 %v116, %v51
    %v124 = vmul.f32 %v116, %v52
    %v125 = vmul.f32 %v116, %v53
    %v126 = vmul.f32 %v116, %v54
    %v127 = vmul.f32 %v116, %v55
    %v128 = vmul.f32 %v116, %v56
    %v129 = vmul.f32 %v116, %v57
    %v130 = vmul.f32 %v116, %v58
    %v131 = vmul.f32 %v116, %v59
    %v132 = vmul.f32 %v116, %v60
    %v133 = vmul.f32 %v116, %v61
    %v134 = vmul.f32 %v116, %v62
    %v135 = vmul.f32 %v116, %v63
    %v136 = vmul.f32 %v116, %v64
    %v137 = vmul.f32 %v116, %v65
    %v138 = vmul.f32 %v116, %v66
    %v139 = vmul.f32 %v116, %v67
    %v140 = vmul.f32 %v116, %v68
    %v141 = vmul.f32 %v116, %v69
    %v142 = vmul.f32 %v116, %v70
    %v143 = vmul.f32 %v116, %v71
    %v144 = vmul.f32 %v116, %v72
    %v145 = vmul.f32 %v116, %v73
    %v146 = vmul.f32 %v116, %v74
    %v147 = vmul.f32 %v116, %v75
    %v148 = vmul.f32 %v116, %v78
    %v149 = vmul.f32 %v116, %v79
    %v150 = vmul.f32 %v116, %v80
    %v151 = vmul.f32 %v116, %v81
    %v152 = vmul.f32 %v116, %v82
    %v153 = vmul.f32 %v116, %v83
    %v154 = vmul.f32 %v116, %v84
    %v155 = vmul.f32 %v116, %v85
    %v156 = vmul.f32 %v116, %v86
    %v157 = vmul.f32 %v116, %v87
    %v158 = vmul.f32 %v116, %v88
    %v159 = vmul.f32 %v116, %v89
    %v160 = vmul.f32 %v116, %v90
    %v161 = vmul.f32 %v116, %v91
    %v162 = vmul.f32 %v116, %v92
    %v163 = vmul.f32 %v116, %v93
    %v164 = vmul.f32 %v116, %v94
    %v165 = vmul.f32 %v116, %v95
    %v166 = vmul.f32 %v116, %v96
    %v167 = vmul.f32 %v116, %v97
    %v168 = vmul.f32 %v116, %v98
    %v169 = vmul.f32 %v116, %v99
    %v170 = vmul.f32 %v116, %v100
    %v171 = vmul.f32 %v116, %v101
    %v172 = vmul.f32 %v116, %v102
    %v173 = vmul.f32 %v116, %v103
    %v174 = vmul.f32 %v116, %v104
    %v175 = vmul.f32 %v116, %v105
    %v176 = vmul.f32 %v116, %v106
    %v177 = vmul.f32 %v116, %v107
    %v178 = vlaneseq
    %v179 = vshrl.u32 %v178, 7
    %v180 = vsub.s32 0, %v179
    %v181 = vrot.slane %v111, %v180
    %v182 = vmul.f32 %v181, %v46
    %v183 = vmul.f32 %v181, %v47
    %v184 = vmul.f32 %v181, %v48
    %v185 = vmul.f32 %v181, %v49
    %v186 = vmul.f32 %v181, %v50
    %v187 = vmul.f32 %v181, %v51
    %v188 = vmul.f32 %v181, %v52
    %v189 = vmul.f32 %v181, %v53
    %v190 = vmul.f32 %v181, %v54
    %v191 = vmul.f32 %v181, %v55
    %v192 = vmul.f32 %v181, %v56
    %v193 = vmul.f32 %v181, %v57
    %v194 = vmul.f32 %v181, %v58
    %v195 = vmul.f32 %v181, %v59
    %v196 = vmul.f32 %v181, %v60
    %v197 = vmul.f32 %v181, %v61
    %v198 = vmul.f32 %v181, %v62
    %v199 = vmul.f32 %v181, %v63
    %v200 = vmul.f32 %v181, %v64
    %v201 = vmul.f32 %v181, %v65
    %v202 = vmul.f32 %v181, %v66
    %v203 = vmul.f32 %v181, %v67
    %v204 = vmul.f32 %v181, %v68
    %v205 = vmul.f32 %v181, %v69
    %v206 = vmul.f32 %v181, %v70
    %v207 = vmul.f32 %v181, %v71
    %v208 = vmul.f32 %v181, %v72
    %v209 = vmul.f32 %v181, %v73
    %v210 = vmul.f32 %v181, %v74
    %v211 = vmul.f32 %v181, %v75
    %v212 = vmul.f32 %v181, %v76
    %v213 = vmul.f32 %v181, %v77
    %v214 = vmul.f32 %v181, %v78
    %v215 = vmul.f32 %v181, %v79
    %v216 = vmul.f32 %v181, %v80
    %v217 = vmul.f32 %v181, %v81
    %v218 = vmul.f32 %v181, %v82
    %v219 = vmul.f32 %v181, %v83
    %v220 = vmul.f32 %v181, %v84
    %v221 = vmul.f32 %v181, %v85
    %v222 = vmul.f32 %v181, %v86
    %v223 = vmul.f32 %v181, %v87
    %v224 = vmul.f32 %v181, %v88
    %v225 = vmul.f32 %v181, %v89
    %v226 = vmul.f32 %v181, %v90
    %v227 = vmul.f32 %v181, %v91
    %v228 = vmul.f32 %v181, %v92
    %v229 = vmul.f32 %v181, %v93
    %v230 = vmul.f32 %v181, %v94
    %v231 = vmul.f32 %v181, %v95
    %v232 = vmul.f32 %v181, %v96
    %v233 = vmul.f32 %v181, %v97
    %v234 = vmul.f32 %v181, %v98
    %v235 = vmul.f32 %v181, %v99
    %v236 = vmul.f32 %v181, %v100
    %v237 = vmul.f32 %v181, %v101
    %v238 = vmul.f32 %v181, %v102
    %v239 = vmul.f32 %v181, %v103
    %v240 = vmul.f32 %v181, %v104
    %v241 = vmul.f32 %v181, %v105
    %v242 = vmul.f32 %v181, %v106
    %v243 = vmul.f32 %v181, %v107
    %v244 = vmul.f32 %v181, %v108
    %v245 = vmul.f32 %v181, %v109
    %v246 = vadd.f32 %v117, %v182
    %v247 = vadd.f32 %v117, %v183
    %v248 = vadd.f32 %v118, %v184
    %v249 = vadd.f32 %v119, %v185
    %v250 = vadd.f32 %v120, %v186
    %v251 = vadd.f32 %v121, %v187
    %v252 = vadd.f32 %v122, %v188
    %v253 = vadd.f32 %v123, %v189
    %v254 = vadd.f32 %v124, %v190
    %v255 = vadd.f32 %v125, %v191
    %v256 = vadd.f32 %v126, %v192
    %v257 = vadd.f32 %v127, %v193
    %v258 = vadd.f32 %v128, %v194
    %v259 = vadd.f32 %v129, %v195
    %v260 = vadd.f32 %v130, %v196
    %v261 = vadd.f32 %v131, %v197
    %v262 = vadd.f32 %v132, %v198
    %v263 = vadd.f32 %v133, %v199
    %v264 = vadd.f32 %v134, %v200
    %v265 = vadd.f32 %v135, %v201
    %v266 = vadd.f32 %v136, %v202
    %v267 = vadd.f32 %v137, %v203
    %v268 = vadd.f32 %v138, %v204
    %v269 = vadd.f32 %v139, %v205
    %v270 = vadd.f32 %v140, %v206
    %v271 = vadd.f32 %v141, %v207
    %v272 = vadd.f32 %v142, %v208
    %v273 = vadd.f32 %v143, %v209
    %v274 = vadd.f32 %v144, %v210
    %v275 = vadd.f32 %v145, %v211
    %v276 = vadd.f32 %v146, %v212
    %v277 = vadd.f32 %v147, %v213
    %v278 = vadd.f32 %v117, %v214
    %v279 = vadd.f32 %v117, %v215
    %v280 = vadd.f32 %v148, %v216
    %v281 = vadd.f32 %v149, %v217
    %v282 = vadd.f32 %v150, %v218
    %v283 = vadd.f32 %v151, %v219
    %v284 = vadd.f32 %v152, %v220
    %v285 = vadd.f32 %v153, %v221
    %v286 = vadd.f32 %v154, %v222
    %v287 = vadd.f32 %v155, %v223
    %v288 = vadd.f32 %v156, %v224
    %v289 = vadd.f32 %v157, %v225
    %v290 = vadd.f32 %v158, %v226
    %v291 = vadd.f32 %v159, %v227
    %v292 = vadd.f32 %v160, %v228
    %v293 = vadd.f32 %v161, %v229
    %v294 = vadd.f32 %v162, %v230
    %v295 = vadd.f32 %v163, %v231
    %v296 = vadd.f32 %v164, %v232
    %v297 = vadd.f32 %v165, %v233
    %v298 = vadd.f32 %v166, %v234
    %v299 = vadd.f32 %v167, %v235
    %v300 = vadd.f32 %v168, %v236
    %v301 = vadd.f32 %v169, %v237
    %v302 = vadd.f32 %v170, %v238
    %v303 = vadd.f32 %v171, %v239
    %v304 = vadd.f32 %v172, %v240
    %v305 = vadd.f32 %v173, %v241
    %v306 = vadd.f32 %v174, %v242
    %v307 = vadd.f32 %v175, %v243
    %v308 = vadd.f32 %v176, %v244
    %v309 = vadd.f32 %v177, %v245
    %v310 = vlaneseq
    %v311 = vshrl.u32 %v310, 7
    %v312 = vsub.s32 0, %v311
    %v313 = vrot.slane %v112, %v312
    %v314 = vmul.f32 %v313, %v48
    %v315 = vmul.f32 %v313, %v49
    %v316 = vmul.f32 %v313, %v50
    %v317 = vmul.f32 %v313, %v51
    %v318 = vmul.f32 %v313, %v52
    %v319 = vmul.f32 %v313, %v53
    %v320 = vmul.f32 %v313, %v54
    %v321 = vmul.f32 %v313, %v55
    %v322 = vmul.f32 %v313, %v56
    %v323 = vmul.f32 %v313, %v57
    %v324 = vmul.f32 %v313, %v58
    %v325 = vmul.f32 %v313, %v59
    %v326 = vmul.f32 %v313, %v60
    %v327 = vmul.f32 %v313, %v61
    %v328 = vmul.f32 %v313, %v62
    %v329 = vmul.f32 %v313, %v63
    %v330 = vmul.f32 %v313, %v64
    %v331 = vmul.f32 %v313, %v65
    %v332 = vmul.f32 %v313, %v66
    %v333 = vmul.f32 %v313, %v67
    %v334 = vmul.f32 %v313, %v68
    %v335 = vmul.f32 %v313, %v69
    %v336 = vmul.f32 %v313, %v70
    %v337 = vmul.f32 %v313, %v71
    %v338 = vmul.f32 %v313, %v72
    %v339 = vmul.f32 %v313, %v73
    %v340 = vmul.f32 %v313, %v74
    %v341 = vmul.f32 %v313, %v75
    %v342 = vmul.f32 %v313, %v76
    %v343 = vmul.f32 %v313, %v77
    %v344 = vmul.f32 %v313, 0.0
    %v345 = vmul.f32 %v313, %v80
    %v346 = vmul.f32 %v313, %v81
    %v347 = vmul.f32 %v313, %v82
    %v348 = vmul.f32 %v313, %v83
    %v349 = vmul.f32 %v313, %v84
    %v350 = vmul.f32 %v313, %v85
    %v351 = vmul.f32 %v313, %v86
    %v352 = vmul.f32 %v313, %v87
    %v353 = vmul.f32 %v313, %v88
    %v354 = vmul.f32 %v313, %v89
    %v355 = vmul.f32 %v313, %v90
    %v356 = vmul.f32 %v313, %v91
    %v357 = vmul.f32 %v313, %v92
    %v358 = vmul.f32 %v313, %v93
    %v359 = vmul.f32 %v313, %v94
    %v360 = vmul.f32 %v313, %v95
    %v361 = vmul.f32 %v313, %v96
    %v362 = vmul.f32 %v313, %v97
    %v363 = vmul.f32 %v313, %v98
    %v364 = vmul.f32 %v313, %v99
    %v365 = vmul.f32 %v313, %v100
    %v366 = vmul.f32 %v313, %v101
    %v367 = vmul.f32 %v313, %v102
    %v368 = vmul.f32 %v313, %v103
    %v369 = vmul.f32 %v313, %v104
    %v370 = vmul.f32 %v313, %v105
    %v371 = vmul.f32 %v313, %v106
    %v372 = vmul.f32 %v313, %v107
    %v373 = vmul.f32 %v313, %v108
    %v374 = vmul.f32 %v313, %v109
    %v375 = vadd.f32 %v246, %v314
    %v376 = vadd.f32 %v247, %v315
    %v377 = vadd.f32 %v248, %v316
    %v378 = vadd.f32 %v249, %v317
    %v379 = vadd.f32 %v250, %v318
    %v380 = vadd.f32 %v251, %v319
    %v381 = vadd.f32 %v252, %v320
    %v382 = vadd.f32 %v253, %v321
    %v383 = vadd.f32 %v254, %v322
    %v384 = vadd.f32 %v255, %v323
    %v385 = vadd.f32 %v256, %v324
    %v386 = vadd.f32 %v257, %v325
    %v387 = vadd.f32 %v258, %v326
    %v388 = vadd.f32 %v259, %v327
    %v389 = vadd.f32 %v260, %v328
    %v390 = vadd.f32 %v261, %v329
    %v391 = vadd.f32 %v262, %v330
    %v392 = vadd.f32 %v263, %v331
    %v393 = vadd.f32 %v264, %v332
    %v394 = vadd.f32 %v265, %v333
    %v395 = vadd.f32 %v266, %v334
    %v396 = vadd.f32 %v267, %v335
    %v397 = vadd.f32 %v268, %v336
    %v398 = vadd.f32 %v269, %v337
    %v399 = vadd.f32 %v270, %v338
    %v400 = vadd.f32 %v271, %v339
    %v401 = vadd.f32 %v272, %v340
    %v402 = vadd.f32 %v273, %v341
    %v403 = vadd.f32 %v274, %v342
    %v404 = vadd.f32 %v275, %v343
    %v405 = vadd.f32 %v276, %v344
    %v406 = vadd.f32 %v277, %v344
    %v407 = vadd.f32 %v278, %v345
    %v408 = vadd.f32 %v279, %v346
    %v409 = vadd.f32 %v280, %v347
    %v410 = vadd.f32 %v281, %v348
    %v411 = vadd.f32 %v282, %v349
    %v412 = vadd.f32 %v283, %v350
    %v413 = vadd.f32 %v284, %v351
    %v414 = vadd.f32 %v285, %v352
    %v415 = vadd.f32 %v286, %v353
    %v416 = vadd.f32 %v287, %v354
    %v417 = vadd.f32 %v288, %v355
    %v418 = vadd.f32 %v289, %v356
    %v419 = vadd.f32 %v290, %v357
    %v420 = vadd.f32 %v291, %v358
    %v421 = vadd.f32 %v292, %v359
    %v422 = vadd.f32 %v293, %v360
    %v423 = vadd.f32 %v294, %v361
    %v424 = vadd.f32 %v295, %v362
    %v425 = vadd.f32 %v296, %v363
    %v426 = vadd.f32 %v297, %v364
    %v427 = vadd.f32 %v298, %v365
    %v428 = vadd.f32 %v299, %v366
    %v429 = vadd.f32 %v300, %v367
    %v430 = vadd.f32 %v301, %v368
    %v431 = vadd.f32 %v302, %v369
    %v432 = vadd.f32 %v303, %v370
    %v433 = vadd.f32 %v304, %v371
    %v434 = vadd.f32 %v305, %v372
    %v435 = vadd.f32 %v306, %v373
    %v436 = vadd.f32 %v307, %v374
    %v437 = vadd.f32 %v308, %v344
    %v438 = vadd.f32 %v309, %v344
    %v439 = vlaneseq
    %v440 = vshrl.u32 %v439, 7
    %v441 = vsub.s32 1, %v440
    %v442 = vrot.slane %v110, %v441
    %v443 = vmul.f32 %v442, 0.0
    %v444 = vmul.f32 %v442, %v46
    %v445 = vmul.f32 %v442, %v47
    %v446 = vmul.f32 %v442, %v48
    %v447 = vmul.f32 %v442, %v49
    %v448 = vmul.f32 %v442, %v50
    %v449 = vmul.f32 %v442, %v51
    %v450 = vmul.f32 %v442, %v52
    %v451 = vmul.f32 %v442, %v53
    %v452 = vmul.f32 %v442, %v54
    %v453 = vmul.f32 %v442, %v55
    %v454 = vmul.f32 %v442, %v56
    %v455 = vmul.f32 %v442, %v57
    %v456 = vmul.f32 %v442, %v58
    %v457 = vmul.f32 %v442, %v59
    %v458 = vmul.f32 %v442, %v60
    %v459 = vmul.f32 %v442, %v61
    %v460 = vmul.f32 %v442, %v62
    %v461 = vmul.f32 %v442, %v63
    %v462 = vmul.f32 %v442, %v64
    %v463 = vmul.f32 %v442, %v65
    %v464 = vmul.f32 %v442, %v66
    %v465 = vmul.f32 %v442, %v67
    %v466 = vmul.f32 %v442, %v68
    %v467 = vmul.f32 %v442, %v69
    %v468 = vmul.f32 %v442, %v70
    %v469 = vmul.f32 %v442, %v71
    %v470 = vmul.f32 %v442, %v72
    %v471 = vmul.f32 %v442, %v73
    %v472 = vmul.f32 %v442, %v74
    %v473 = vmul.f32 %v442, %v75
    %v474 = vmul.f32 %v442, %v78
    %v475 = vmul.f32 %v442, %v79
    %v476 = vmul.f32 %v442, %v80
    %v477 = vmul.f32 %v442, %v81
    %v478 = vmul.f32 %v442, %v82
    %v479 = vmul.f32 %v442, %v83
    %v480 = vmul.f32 %v442, %v84
    %v481 = vmul.f32 %v442, %v85
    %v482 = vmul.f32 %v442, %v86
    %v483 = vmul.f32 %v442, %v87
    %v484 = vmul.f32 %v442, %v88
    %v485 = vmul.f32 %v442, %v89
    %v486 = vmul.f32 %v442, %v90
    %v487 = vmul.f32 %v442, %v91
    %v488 = vmul.f32 %v442, %v92
    %v489 = vmul.f32 %v442, %v93
    %v490 = vmul.f32 %v442, %v94
    %v491 = vmul.f32 %v442, %v95
    %v492 = vmul.f32 %v442, %v96
    %v493 = vmul.f32 %v442, %v97
    %v494 = vmul.f32 %v442, %v98
    %v495 = vmul.f32 %v442, %v99
    %v496 = vmul.f32 %v442, %v100
    %v497 = vmul.f32 %v442, %v101
    %v498 = vmul.f32 %v442, %v102
    %v499 = vmul.f32 %v442, %v103
    %v500 = vmul.f32 %v442, %v104
    %v501 = vmul.f32 %v442, %v105
    %v502 = vmul.f32 %v442, %v106
    %v503 = vmul.f32 %v442, %v107
    %v504 = vlaneseq
    %v505 = vshrl.u32 %v504, 7
    %v506 = vsub.s32 1, %v505
    %v507 = vrot.slane %v111, %v506
    %v508 = vmul.f32 %v507, %v46
    %v509 = vmul.f32 %v507, %v47
    %v510 = vmul.f32 %v507, %v48
    %v511 = vmul.f32 %v507, %v49
    %v512 = vmul.f32 %v507, %v50
    %v513 = vmul.f32 %v507, %v51
    %v514 = vmul.f32 %v507, %v52
    %v515 = vmul.f32 %v507, %v53
    %v516 = vmul.f32 %v507, %v54
    %v517 = vmul.f32 %v507, %v55
    %v518 = vmul.f32 %v507, %v56
    %v519 = vmul.f32 %v507, %v57
    %v520 = vmul.f32 %v507, %v58
    %v521 = vmul.f32 %v507, %v59
    %v522 = vmul.f32 %v507, %v60
    %v523 = vmul.f32 %v507, %v61
    %v524 = vmul.f32 %v507, %v62
    %v525 = vmul.f32 %v507, %v63
    %v526 = vmul.f32 %v507, %v64
    %v527 = vmul.f32 %v507, %v65
    %v528 = vmul.f32 %v507, %v66
    %v529 = vmul.f32 %v507, %v67
    %v530 = vmul.f32 %v507, %v68
    %v531 = vmul.f32 %v507, %v69
    %v532 = vmul.f32 %v507, %v70
    %v533 = vmul.f32 %v507, %v71
    %v534 = vmul.f32 %v507, %v72
    %v535 = vmul.f32 %v507, %v73
    %v536 = vmul.f32 %v507, %v74
    %v537 = vmul.f32 %v507, %v75
    %v538 = vmul.f32 %v507, %v76
    %v539 = vmul.f32 %v507, %v77
    %v540 = vmul.f32 %v507, %v78
    %v541 = vmul.f32 %v507, %v79
    %v542 = vmul.f32 %v507, %v80
    %v543 = vmul.f32 %v507, %v81
    %v544 = vmul.f32 %v507, %v82
    %v545 = vmul.f32 %v507, %v83
    %v546 = vmul.f32 %v507, %v84
    %v547 = vmul.f32 %v507, %v85
    %v548 = vmul.f32 %v507, %v86
    %v549 = vmul.f32 %v507, %v87
    %v550 = vmul.f32 %v507, %v88
    %v551 = vmul.f32 %v507, %v89
    %v552 = vmul.f32 %v507, %v90
    %v553 = vmul.f32 %v507, %v91
    %v554 = vmul.f32 %v507, %v92
    %v555 = vmul.f32 %v507, %v93
    %v556 = vmul.f32 %v507, %v94
    %v557 = vmul.f32 %v507, %v95
    %v558 = vmul.f32 %v507, %v96
    %v559 = vmul.f32 %v507, %v97
    %v560 = vmul.f32 %v507, %v98
    %v561 = vmul.f32 %v507, %v99
    %v562 = vmul.f32 %v507, %v100
    %v563 = vmul.f32 %v507, %v101
    %v564 = vmul.f32 %v507, %v102
    %v565 = vmul.f32 %v507, %v103
    %v566 = vmul.f32 %v507, %v104
    %v567 = vmul.f32 %v507, %v105
    %v568 = vmul.f32 %v507, %v106
    %v569 = vmul.f32 %v507, %v107
    %v570 = vmul.f32 %v507, %v108
    %v571 = vmul.f32 %v507, %v109
    %v572 = vadd.f32 %v443, %v508
    %v573 = vadd.f32 %v443, %v509
    %v574 = vadd.f32 %v444, %v510
    %v575 = vadd.f32 %v445, %v511
    %v576 = vadd.f32 %v446, %v512
    %v577 = vadd.f32 %v447, %v513
    %v578 = vadd.f32 %v448, %v514
    %v579 = vadd.f32 %v449, %v515
    %v580 = vadd.f32 %v450, %v516
    %v581 = vadd.f32 %v451, %v517
    %v582 = vadd.f32 %v452, %v518
    %v583 = vadd.f32 %v453, %v519
    %v584 = vadd.f32 %v454, %v520
    %v585 = vadd.f32 %v455, %v521
    %v586 = vadd.f32 %v456, %v522
    %v587 = vadd.f32 %v457, %v523
    %v588 = vadd.f32 %v458, %v524
    %v589 = vadd.f32 %v459, %v525
    %v590 = vadd.f32 %v460, %v526
    %v591 = vadd.f32 %v461, %v527
    %v592 = vadd.f32 %v462, %v528
    %v593 = vadd.f32 %v463, %v529
    %v594 = vadd.f32 %v464, %v530
    %v595 = vadd.f32 %v465, %v531
    %v596 = vadd.f32 %v466, %v532
    %v597 = vadd.f32 %v467, %v533
    %v598 = vadd.f32 %v468, %v534
    %v599 = vadd.f32 %v469, %v535
    %v600 = vadd.f32 %v470, %v536
    %v601 = vadd.f32 %v471, %v537
    %v602 = vadd.f32 %v472, %v538
    %v603 = vadd.f32 %v473, %v539
    %v604 = vadd.f32 %v443, %v540
    %v605 = vadd.f32 %v443, %v541
    %v606 = vadd.f32 %v474, %v542
    %v607 = vadd.f32 %v475, %v543
    %v608 = vadd.f32 %v476, %v544
    %v609 = vadd.f32 %v477, %v545
    %v610 = vadd.f32 %v478, %v546
    %v611 = vadd.f32 %v479, %v547
    %v612 = vadd.f32 %v480, %v548
    %v613 = vadd.f32 %v481, %v549
    %v614 = vadd.f32 %v482, %v550
    %v615 = vadd.f32 %v483, %v551
    %v616 = vadd.f32 %v484, %v552
    %v617 = vadd.f32 %v485, %v553
    %v618 = vadd.f32 %v486, %v554
    %v619 = vadd.f32 %v487, %v555
    %v620 = vadd.f32 %v488, %v556
    %v621 = vadd.f32 %v489, %v557
    %v622 = vadd.f32 %v490, %v558
    %v623 = vadd.f32 %v491, %v559
    %v624 = vadd.f32 %v492, %v560
    %v625 = vadd.f32 %v493, %v561
    %v626 = vadd.f32 %v494, %v562
    %v627 = vadd.f32 %v495, %v563
    %v628 = vadd.f32 %v496, %v564
    %v629 = vadd.f32 %v497, %v565
    %v630 = vadd.f32 %v498, %v566
    %v631 = vadd.f32 %v499, %v567
    %v632 = vadd.f32 %v500, %v568
    %v633 = vadd.f32 %v501, %v569
    %v634 = vadd.f32 %v502, %v570
    %v635 = vadd.f32 %v503, %v571
    %v636 = vlaneseq
    %v637 = vshrl.u32 %v636, 7
    %v638 = vsub.s32 1, %v637
    %v639 = vrot.slane %v112, %v638
    %v640 = vmul.f32 %v639, %v48
    %v641 = vmul.f32 %v639, %v49
    %v642 = vmul.f32 %v639, %v50
    %v643 = vmul.f32 %v639, %v51
    %v644 = vmul.f32 %v639, %v52
    %v645 = vmul.f32 %v639, %v53
    %v646 = vmul.f32 %v639, %v54
    %v647 = vmul.f32 %v639, %v55
    %v648 = vmul.f32 %v639, %v56
    %v649 = vmul.f32 %v639, %v57
    %v650 = vmul.f32 %v639, %v58
    %v651 = vmul.f32 %v639, %v59
    %v652 = vmul.f32 %v639, %v60
    %v653 = vmul.f32 %v639, %v61
    %v654 = vmul.f32 %v639, %v62
    %v655 = vmul.f32 %v639, %v63
    %v656 = vmul.f32 %v639, %v64
    %v657 = vmul.f32 %v639, %v65
    %v658 = vmul.f32 %v639, %v66
    %v659 = vmul.f32 %v639, %v67
    %v660 = vmul.f32 %v639, %v68
    %v661 = vmul.f32 %v639, %v69
    %v662 = vmul.f32 %v639, %v70
    %v663 = vmul.f32 %v639, %v71
    %v664 = vmul.f32 %v639, %v72
    %v665 = vmul.f32 %v639, %v73
    %v666 = vmul.f32 %v639, %v74
    %v667 = vmul.f32 %v639, %v75
    %v668 = vmul.f32 %v639, %v76
    %v669 = vmul.f32 %v639, %v77
    %v670 = vmul.f32 %v639, 0.0
    %v671 = vmul.f32 %v639, %v80
    %v672 = vmul.f32 %v639, %v81
    %v673 = vmul.f32 %v639, %v82
    %v674 = vmul.f32 %v639, %v83
    %v675 = vmul.f32 %v639, %v84
    %v676 = vmul.f32 %v639, %v85
    %v677 = vmul.f32 %v639, %v86
    %v678 = vmul.f32 %v639, %v87
    %v679 = vmul.f32 %v639, %v88
    %v680 = vmul.f32 %v639, %v89
    %v681 = vmul.f32 %v639, %v90
    %v682 = vmul.f32 %v639, %v91
    %v683 = vmul.f32 %v639, %v92
    %v684 = vmul.f32 %v639, %v93
    %v685 = vmul.f32 %v639, %v94
    %v686 = vmul.f32 %v639, %v95
    %v687 = vmul.f32 %v639, %v96
    %v688 = vmul.f32 %v639, %v97
    %v689 = vmul.f32 %v639, %v98
    %v690 = vmul.f32 %v639, %v99
    %v691 = vmul.f32 %v639, %v100
    %v692 = vmul.f32 %v639, %v101
    %v693 = vmul.f32 %v639, %v102
    %v694 = vmul.f32 %v639, %v103
    %v695 = vmul.f32 %v639, %v104
    %v696 = vmul.f32 %v639, %v105
    %v697 = vmul.f32 %v639, %v106
    %v698 = vmul.f32 %v639, %v107
    %v699 = vmul.f32 %v639, %v108
    %v700 = vmul.f32 %v639, %v109
    %v701 = vadd.f32 %v572, %v640
    %v702 = vadd.f32 %v573, %v641
    %v703 = vadd.f32 %v574, %v642
    %v704 = vadd.f32 %v575, %v643
    %v705 = vadd.f32 %v576, %v644
    %v706 = vadd.f32 %v577, %v645
    %v707 = vadd.f32 %v578, %v646
    %v708 = vadd.f32 %v579, %v647
    %v709 = vadd.f32 %v580, %v648
    %v710 = vadd.f32 %v581, %v649
    %v711 = vadd.f32 %v582, %v650
    %v712 = vadd.f32 %v583, %v651
    %v713 = vadd.f32 %v584, %v652
    %v714 = vadd.f32 %v585, %v653
    %v715 = vadd.f32 %v586, %v654
    %v716 = vadd.f32 %v587, %v655
    %v717 = vadd.f32 %v588, %v656
    %v718 = vadd.f32 %v589, %v657
    %v719 = vadd.f32 %v590, %v658
    %v720 = vadd.f32 %v591, %v659
    %v721 = vadd.f32 %v592, %v660
    %v722 = vadd.f32 %v593, %v661
    %v723 = vadd.f32 %v594, %v662
    %v724 = vadd.f32 %v595, %v663
    %v725 = vadd.f32 %v596, %v664
    %v726 = vadd.f32 %v597, %v665
    %v727 = vadd.f32 %v598, %v666
    %v728 = vadd.f32 %v599, %v667
    %v729 = vadd.f32 %v600, %v668
    %v730 = vadd.f32 %v601, %v669
    %v731 = vadd.f32 %v602, %v670
    %v732 = vadd.f32 %v603, %v670
    %v733 = vadd.f32 %v604, %v671
    %v734 = vadd.f32 %v605, %v672
    %v735 = vadd.f32 %v606, %v673
    %v736 = vadd.f32 %v607, %v674
    %v737 = vadd.f32 %v608, %v675
    %v738 = vadd.f32 %v609, %v676
    %v739 = vadd.f32 %v610, %v677
    %v740 = vadd.f32 %v611, %v678
    %v741 = vadd.f32 %v612, %v679
    %v742 = vadd.f32 %v613, %v680
    %v743 = vadd.f32 %v614, %v681
    %v744 = vadd.f32 %v615, %v682
    %v745 = vadd.f32 %v616, %v683
    %v746 = vadd.f32 %v617, %v684
    %v747 = vadd.f32 %v618, %v685
    %v748 = vadd.f32 %v619, %v686
    %v749 = vadd.f32 %v620, %v687
    %v750 = vadd.f32 %v621, %v688
    %v751 = vadd.f32 %v622, %v689
    %v752 = vadd.f32 %v623, %v690
    %v753 = vadd.f32 %v624, %v691
    %v754 = vadd.f32 %v625, %v692
    %v755 = vadd.f32 %v626, %v693
    %v756 = vadd.f32 %v627, %v694
    %v757 = vadd.f32 %v628, %v695
    %v758 = vadd.f32 %v629, %v696
    %v759 = vadd.f32 %v630, %v697
    %v760 = vadd.f32 %v631, %v698
    %v761 = vadd.f32 %v632, %v699
    %v762 = vadd.f32 %v633, %v700
    %v763 = vadd.f32 %v634, %v670
    %v764 = vadd.f32 %v635, %v670
    %v765 = vlaneseq
    %v766 = vshrl.u32 %v765, 7
    %v767 = vsub.s32 2, %v766
    %v768 = vrot.slane %v110, %v767
    %v769 = vmul.f32 %v768, 0.0
    %v770 = vmul.f32 %v768, %v46
    %v771 = vmul.f32 %v768, %v47
    %v772 = vmul.f32 %v768, %v48
    %v773 = vmul.f32 %v768, %v49
    %v774 = vmul.f32 %v768, %v50
    %v775 = vmul.f32 %v768, %v51
    %v776 = vmul.f32 %v768, %v52
    %v777 = vmul.f32 %v768, %v53
    %v778 = vmul.f32 %v768, %v54
    %v779 = vmul.f32 %v768, %v55
    %v780 = vmul.f32 %v768, %v56
    %v781 = vmul.f32 %v768, %v57
    %v782 = vmul.f32 %v768, %v58
    %v783 = vmul.f32 %v768, %v59
    %v784 = vmul.f32 %v768, %v60
    %v785 = vmul.f32 %v768, %v61
    %v786 = vmul.f32 %v768, %v62
    %v787 = vmul.f32 %v768, %v63
    %v788 = vmul.f32 %v768, %v64
    %v789 = vmul.f32 %v768, %v65
    %v790 = vmul.f32 %v768, %v66
    %v791 = vmul.f32 %v768, %v67
    %v792 = vmul.f32 %v768, %v68
    %v793 = vmul.f32 %v768, %v69
    %v794 = vmul.f32 %v768, %v70
    %v795 = vmul.f32 %v768, %v71
    %v796 = vmul.f32 %v768, %v72
    %v797 = vmul.f32 %v768, %v73
    %v798 = vmul.f32 %v768, %v74
    %v799 = vmul.f32 %v768, %v75
    %v800 = vmul.f32 %v768, %v78
    %v801 = vmul.f32 %v768, %v79
    %v802 = vmul.f32 %v768, %v80
    %v803 = vmul.f32 %v768, %v81
    %v804 = vmul.f32 %v768, %v82
    %v805 = vmul.f32 %v768, %v83
    %v806 = vmul.f32 %v768, %v84
    %v807 = vmul.f32 %v768, %v85
    %v808 = vmul.f32 %v768, %v86
    %v809 = vmul.f32 %v768, %v87
    %v810 = vmul.f32 %v768, %v88
    %v811 = vmul.f32 %v768, %v89
    %v812 = vmul.f32 %v768, %v90
    %v813 = vmul.f32 %v768, %v91
    %v814 = vmul.f32 %v768, %v92
    %v815 = vmul.f32 %v768, %v93
    %v816 = vmul.f32 %v768, %v94
    %v817 = vmul.f32 %v768, %v95
    %v818 = vmul.f32 %v768, %v96
    %v819 = vmul.f32 %v768, %v97
    %v820 = vmul.f32 %v768, %v98
    %v821 = vmul.f32 %v768, %v99
    %v822 = vmul.f32 %v768, %v100
    %v823 = vmul.f32 %v768, %v101
    %v824 = vmul.f32 %v768, %v102
    %v825 = vmul.f32 %v768, %v103
    %v826 = vmul.f32 %v768, %v104
    %v827 = vmul.f32 %v768, %v105
    %v828 = vmul.f32 %v768, %v106
    %v829 = vmul.f32 %v768, %v107
    %v830 = vlaneseq
    %v831 = vshrl.u32 %v830, 7
    %v832 = vsub.s32 2, %v831
    %v833 = vrot.slane %v111, %v832
    %v834 = vmul.f32 %v833, %v46
    %v835 = vmul.f32 %v833, %v47
    %v836 = vmul.f32 %v833, %v48
    %v837 = vmul.f32 %v833, %v49
    %v838 = vmul.f32 %v833, %v50
    %v839 = vmul.f32 %v833, %v51
    %v840 = vmul.f32 %v833, %v52
    %v841 = vmul.f32 %v833, %v53
    %v842 = vmul.f32 %v833, %v54
    %v843 = vmul.f32 %v833, %v55
    %v844 = vmul.f32 %v833, %v56
    %v845 = vmul.f32 %v833, %v57
    %v846 = vmul.f32 %v833, %v58
    %v847 = vmul.f32 %v833, %v59
    %v848 = vmul.f32 %v833, %v60
    %v849 = vmul.f32 %v833, %v61
    %v850 = vmul.f32 %v833, %v62
    %v851 = vmul.f32 %v833, %v63
    %v852 = vmul.f32 %v833, %v64
    %v853 = vmul.f32 %v833, %v65
    %v854 = vmul.f32 %v833, %v66
    %v855 = vmul.f32 %v833, %v67
    %v856 = vmul.f32 %v833, %v68
    %v857 = vmul.f32 %v833, %v69
    %v858 = vmul.f32 %v833, %v70
    %v859 = vmul.f32 %v833, %v71
    %v860 = vmul.f32 %v833, %v72
    %v861 = vmul.f32 %v833, %v73
    %v862 = vmul.f32 %v833, %v74
    %v863 = vmul.f32 %v833, %v75
    %v864 = vmul.f32 %v833, %v76
    %v865 = vmul.f32 %v833, %v77
    %v866 = vmul.f32 %v833, %v78
    %v867 = vmul.f32 %v833, %v79
    %v868 = vmul.f32 %v833, %v80
    %v869 = vmul.f32 %v833, %v81
    %v870 = vmul.f32 %v833, %v82
    %v871 = vmul.f32 %v833, %v83
    %v872 = vmul.f32 %v833, %v84
    %v873 = vmul.f32 %v833, %v85
    %v874 = vmul.f32 %v833, %v86
    %v875 = vmul.f32 %v833, %v87
    %v876 = vmul.f32 %v833, %v88
    %v877 = vmul.f32 %v833, %v89
    %v878 = vmul.f32 %v833, %v90
    %v879 = vmul.f32 %v833, %v91
    %v880 = vmul.f32 %v833, %v92
    %v881 = vmul.f32 %v833, %v93
    %v882 = vmul.f32 %v833, %v94
    %v883 = vmul.f32 %v833, %v95
    %v884 = vmul.f32 %v833, %v96
    %v885 = vmul.f32 %v833, %v97
    %v886 = vmul.f32 %v833, %v98
    %v887 = vmul.f32 %v833, %v99
    %v888 = vmul.f32 %v833, %v100
    %v889 = vmul.f32 %v833, %v101
    %v890 = vmul.f32 %v833, %v102
    %v891 = vmul.f32 %v833, %v103
    %v892 = vmul.f32 %v833, %v104
    %v893 = vmul.f32 %v833, %v105
    %v894 = vmul.f32 %v833, %v106
    %v895 = vmul.f32 %v833, %v107
    %v896 = vmul.f32 %v833, %v108
    %v897 = vmul.f32 %v833, %v109
    %v898 = vadd.f32 %v769, %v834
    %v899 = vadd.f32 %v769, %v835
    %v900 = vadd.f32 %v770, %v836
    %v901 = vadd.f32 %v771, %v837
    %v902 = vadd.f32 %v772, %v838
    %v903 = vadd.f32 %v773, %v839
    %v904 = vadd.f32 %v774, %v840
    %v905 = vadd.f32 %v775, %v841
    %v906 = vadd.f32 %v776, %v842
    %v907 = vadd.f32 %v777, %v843
    %v908 = vadd.f32 %v778, %v844
    %v909 = vadd.f32 %v779, %v845
    %v910 = vadd.f32 %v780, %v846
    %v911 = vadd.f32 %v781, %v847
    %v912 = vadd.f32 %v782, %v848
    %v913 = vadd.f32 %v783, %v849
    %v914 = vadd.f32 %v784, %v850
    %v915 = vadd.f32 %v785, %v851
    %v916 = vadd.f32 %v786, %v852
    %v917 = vadd.f32 %v787, %v853
    %v918 = vadd.f32 %v788, %v854
    %v919 = vadd.f32 %v789, %v855
    %v920 = vadd.f32 %v790, %v856
    %v921 = vadd.f32 %v791, %v857
    %v922 = vadd.f32 %v792, %v858
    %v923 = vadd.f32 %v793, %v859
    %v924 = vadd.f32 %v794, %v860
    %v925 = vadd.f32 %v795, %v861
    %v926 = vadd.f32 %v796, %v862
    %v927 = vadd.f32 %v797, %v863
    %v928 = vadd.f32 %v798, %v864
    %v929 = vadd.f32 %v799, %v865
    %v930 = vadd.f32 %v769, %v866
    %v931 = vadd.f32 %v769, %v867
    %v932 = vadd.f32 %v800, %v868
    %v933 = vadd.f32 %v801, %v869
    %v934 = vadd.f32 %v802, %v870
    %v935 = vadd.f32 %v803, %v871
    %v936 = vadd.f32 %v804, %v872
    %v937 = vadd.f32 %v805, %v873
    %v938 = vadd.f32 %v806, %v874
    %v939 = vadd.f32 %v807, %v875
    %v940 = vadd.f32 %v808, %v876
    %v941 = vadd.f32 %v809, %v877
    %v942 = vadd.f32 %v810, %v878
    %v943 = vadd.f32 %v811, %v879
    %v944 = vadd.f32 %v812, %v880
    %v945 = vadd.f32 %v813, %v881
    %v946 = vadd.f32 %v814, %v882
    %v947 = vadd.f32 %v815, %v883
    %v948 = vadd.f32 %v816, %v884
    %v949 = vadd.f32 %v817, %v885
    %v950 = vadd.f32 %v818, %v886
    %v951 = vadd.f32 %v819, %v887
    %v952 = vadd.f32 %v820, %v888
    %v953 = vadd.f32 %v821, %v889
    %v954 = vadd.f32 %v822, %v890
    %v955 = vadd.f32 %v823, %v891
    %v956 = vadd.f32 %v824, %v892
    %v957 = vadd.f32 %v825, %v893
    %v958 = vadd.f32 %v826, %v894
    %v959 = vadd.f32 %v827, %v895
    %v960 = vadd.f32 %v828, %v896
    %v961 = vadd.f32 %v829, %v897
    %v962 = vlaneseq
    %v963 = vshrl.u32 %v962, 7
    %v964 = vsub.s32 2, %v963
    %v965 = vrot.slane %v112, %v964
    %v966 = vmul.f32 %v965, %v48
    %v967 = vmul.f32 %v965, %v49
    %v968 = vmul.f32 %v965, %v50
    %v969 = vmul.f32 %v965, %v51
    %v970 = vmul.f32 %v965, %v52
    %v971 = vmul.f32 %v965, %v53
    %v972 = vmul.f32 %v965, %v54
    %v973 = vmul.f32 %v965, %v55
    %v974 = vmul.f32 %v965, %v56
    %v975 = vmul.f32 %v965, %v57
    %v976 = vmul.f32 %v965, %v58
    %v977 = vmul.f32 %v965, %v59
    %v978 = vmul.f32 %v965, %v60
    %v979 = vmul.f32 %v965, %v61
    %v980 = vmul.f32 %v965, %v62
    %v981 = vmul.f32 %v965, %v63
    %v982 = vmul.f32 %v965, %v64
    %v983 = vmul.f32 %v965, %v65
    %v984 = vmul.f32 %v965, %v66
    %v985 = vmul.f32 %v965, %v67
    %v986 = vmul.f32 %v965, %v68
    %v987 = vmul.f32 %v965, %v69
    %v988 = vmul.f32 %v965, %v70
    %v989 = vmul.f32 %v965, %v71
    %v990 = vmul.f32 %v965, %v72
    %v991 = vmul.f32 %v965, %v73
    %v992 = vmul.f32 %v965, %v74
    %v993 = vmul.f32 %v965, %v75
    %v994 = vmul.f32 %v965, %v76
    %v995 = vmul.f32 %v965, %v77
    %v996 = vmul.f32 %v965, 0.0
    %v997 = vmul.f32 %v965, %v80
    %v998 = vmul.f32 %v965, %v81
    %v999 = vmul.f32 %v965, %v82
    %v1000 = vmul.f32 %v965, %v83
    %v1001 = vmul.f32 %v965, %v84
    %v1002 = vmul.f32 %v965, %v85
    %v1003 = vmul.f32 %v965, %v86
    %v1004 = vmul.f32 %v965, %v87
    %v1005 = vmul.f32 %v965, %v88
    %v1006 = vmul.f32 %v965, %v89
    %v1007 = vmul.f32 %v965, %v90
    %v1008 = vmul.f32 %v965, %v91
    %v1009 = vmul.f32 %v965, %v92
    %v1010 = vmul.f32 %v965, %v93
    %v1011 = vmul.f32 %v965, %v94
    %v1012 = vmul.f32 %v965, %v95
    %v1013 = vmul.f32 %v965, %v96
    %v1014 = vmul.f32 %v965, %v97
    %v1015 = vmul.f32 %v965, %v98
    %v1016 = vmul.f32 %v965, %v99
    %v1017 = vmul.f32 %v965, %v100
    %v1018 = vmul.f32 %v965, %v101
    %v1019 = vmul.f32 %v965, %v102
    %v1020 = vmul.f32 %v965, %v103
    %v1021 = vmul.f32 %v965, %v104
    %v1022 = vmul.f32 %v965, %v105
    %v1023 = vmul.f32 %v965, %v106
    %v1024 = vmul.f32 %v965, %v107
    %v1025 = vmul.f32 %v965, %v108
    %v1026 = vmul.f32 %v965, %v109
    %v1027 = vadd.f32 %v898, %v966
    %v1028 = vadd.f32 %v899, %v967
    %v1029 = vadd.f32 %v900, %v968
    %v1030 = vadd.f32 %v901, %v969
    %v1031 = vadd.f32 %v902, %v970
    %v1032 = vadd.f32 %v903, %v971
    %v1033 = vadd.f32 %v904, %v972
    %v1034 = vadd.f32 %v905, %v973
    %v1035 = vadd.f32 %v906, %v974
    %v1036 = vadd.f32 %v907, %v975
    %v1037 = vadd.f32 %v908, %v976
    %v1038 = vadd.f32 %v909, %v977
    %v1039 = vadd.f32 %v910, %v978
    %v1040 = vadd.f32 %v911, %v979
    %v1041 = vadd.f32 %v912, %v980
    %v1042 = vadd.f32 %v913, %v981
    %v1043 = vadd.f32 %v914, %v982
    %v1044 = vadd.f32 %v915, %v983
    %v1045 = vadd.f32 %v916, %v984
    %v1046 = vadd.f32 %v917, %v985
    %v1047 = vadd.f32 %v918, %v986
    %v1048 = vadd.f32 %v919, %v987
    %v1049 = vadd.f32 %v920, %v988
    %v1050 = vadd.f32 %v921, %v989
    %v1051 = vadd.f32 %v922, %v990
    %v1052 = vadd.f32 %v923, %v991
    %v1053 = vadd.f32 %v924, %v992
    %v1054 = vadd.f32 %v925, %v993
    %v1055 = vadd.f32 %v926, %v994
    %v1056 = vadd.f32 %v927, %v995
    %v1057 = vadd.f32 %v928, %v996
    %v1058 = vadd.f32 %v929, %v996
    %v1059 = vadd.f32 %v930, %v997
    %v1060 = vadd.f32 %v931, %v998
    %v1061 = vadd.f32 %v932, %v999
    %v1062 = vadd.f32 %v933, %v1000
    %v1063 = vadd.f32 %v934, %v1001
    %v1064 = vadd.f32 %v935, %v1002
    %v1065 = vadd.f32 %v936, %v1003
    %v1066 = vadd.f32 %v937, %v1004
    %v1067 = vadd.f32 %v938, %v1005
    %v1068 = vadd.f32 %v939, %v1006
    %v1069 = vadd.f32 %v940, %v1007
    %v1070 = vadd.f32 %v941, %v1008
    %v1071 = vadd.f32 %v942, %v1009
    %v1072 = vadd.f32 %v943, %v1010
    %v1073 = vadd.f32 %v944, %v1011
    %v1074 = vadd.f32 %v945, %v1012
    %v1075 = vadd.f32 %v946, %v1013
    %v1076 = vadd.f32 %v947, %v1014
    %v1077 = vadd.f32 %v948, %v1015
    %v1078 = vadd.f32 %v949, %v1016
    %v1079 = vadd.f32 %v950, %v1017
    %v1080 = vadd.f32 %v951, %v1018
    %v1081 = vadd.f32 %v952, %v1019
    %v1082 = vadd.f32 %v953, %v1020
    %v1083 = vadd.f32 %v954, %v1021
    %v1084 = vadd.f32 %v955, %v1022
    %v1085 = vadd.f32 %v956, %v1023
    %v1086 = vadd.f32 %v957, %v1024
    %v1087 = vadd.f32 %v958, %v1025
    %v1088 = vadd.f32 %v959, %v1026
    %v1089 = vadd.f32 %v960, %v996
    %v1090 = vadd.f32 %v961, %v996
    %vm1155 = vcmask 1046528
    %v1156 = vrot.slane %v701, 1
    %v1157 = vrot.slane %v702, 1
    %v1158 = vsel %vm1155, %v1156, %v1157
    %v1159 = vrot.slane %v703, 1
    %v1160 = vrot.slane %v704, 1
    %v1161 = vsel %vm1155, %v1159, %v1160
    %v1162 = vrot.slane %v705, 1
    %v1163 = vrot.slane %v706, 1
    %v1164 = vsel %vm1155, %v1162, %v1163
    %v1165 = vrot.slane %v707, 1
    %v1166 = vrot.slane %v708, 1
    %v1167 = vsel %vm1155, %v1165, %v1166
    %v1168 = vrot.slane %v709, 1
    %v1169 = vrot.slane %v710, 1
    %v1170 = vsel %vm1155, %v1168, %v1169
    %v1171 = vrot.slane %v711, 1
    %v1172 = vrot.slane %v712, 1
    %v1173 = vsel %vm1155, %v1171, %v1172
    %v1174 = vrot.slane %v713, 1
    %v1175 = vrot.slane %v714, 1
    %v1176 = vsel %vm1155, %v1174, %v1175
    %v1177 = vrot.slane %v715, 1
    %v1178 = vrot.slane %v716, 1
    %v1179 = vsel %vm1155, %v1177, %v1178
    %v1180 = vrot.slane %v717, 1
    %v1181 = vrot.slane %v718, 1
    %v1182 = vsel %vm1155, %v1180, %v1181
    %v1183 = vrot.slane %v719, 1
    %v1184 = vrot.slane %v720, 1
    %v1185 = vsel %vm1155, %v1183, %v1184
    %v1186 = vrot.slane %v721, 1
    %v1187 = vrot.slane %v722, 1
    %v1188 = vsel %vm1155, %v1186, %v1187
    %v1189 = vrot.slane %v723, 1
    %v1190 = vrot.slane %v724, 1
    %v1191 = vsel %vm1155, %v1189, %v1190
    %v1192 = vrot.slane %v725, 1
    %v1193 = vrot.slane %v726, 1
    %v1194 = vsel %vm1155, %v1192, %v1193
    %v1195 = vrot.slane %v727, 1
    %v1196 = vrot.slane %v728, 1
    %v1197 = vsel %vm1155, %v1195, %v1196
    %v1198 = vrot.slane %v729, 1
    %v1199 = vrot.slane %v730, 1
    %v1200 = vsel %vm1155, %v1198, %v1199
    %v1201 = vrot.slane %v731, 1
    %v1202 = vrot.slane %v732, 1
    %v1203 = vsel %vm1155, %v1201, %v1202
    %v1204 = vrot.slane %v733, 1
    %v1205 = vrot.slane %v734, 1
    %v1206 = vsel %vm1155, %v1204, %v1205
    %v1207 = vrot.slane %v735, 1
    %v1208 = vrot.slane %v736, 1
    %v1209 = vsel %vm1155, %v1207, %v1208
    %v1210 = vrot.slane %v737, 1
    %v1211 = vrot.slane %v738, 1
    %v1212 = vsel %vm1155, %v1210, %v1211
    %v1213 = vrot.slane %v739, 1
    %v1214 = vrot.slane %v740, 1
    %v1215 = vsel %vm1155, %v1213, %v1214
    %v1216 = vrot.slane %v741, 1
    %v1217 = vrot.slane %v742, 1
    %v1218 = vsel %vm1155, %v1216, %v1217
    %v1219 = vrot.slane %v743, 1
    %v1220 = vrot.slane %v744, 1
    %v1221 = vsel %vm1155, %v1219, %v1220
    %v1222 = vrot.slane %v745, 1
    %v1223 = vrot.slane %v746, 1
    %v1224 = vsel %vm1155, %v1222, %v1223
    %v1225 = vrot.slane %v747, 1
    %v1226 = vrot.slane %v748, 1
    %v1227 = vsel %vm1155, %v1225, %v1226
    %v1228 = vrot.slane %v749, 1
    %v1229 = vrot.slane %v750, 1
    %v1230 = vsel %vm1155, %v1228, %v1229
    %v1231 = vrot.slane %v751, 1
    %v1232 = vrot.slane %v752, 1
    %v1233 = vsel %vm1155, %v1231, %v1232
    %v1234 = vrot.slane %v753, 1
    %v1235 = vrot.slane %v754, 1
    %v1236 = vsel %vm1155, %v1234, %v1235
    %v1237 = vrot.slane %v755, 1
    %v1238 = vrot.slane %v756, 1
    %v1239 = vsel %vm1155, %v1237, %v1238
    %v1240 = vrot.slane %v757, 1
    %v1241 = vrot.slane %v758, 1
    %v1242 = vsel %vm1155, %v1240, %v1241
    %v1243 = vrot.slane %v759, 1
    %v1244 = vrot.slane %v760, 1
    %v1245 = vsel %vm1155, %v1243, %v1244
    %v1246 = vrot.slane %v761, 1
    %v1247 = vrot.slane %v762, 1
    %v1248 = vsel %vm1155, %v1246, %v1247
    %v1249 = vrot.slane %v763, 1
    %v1250 = vrot.slane %v764, 1
    %v1251 = vsel %vm1155, %v1249, %v1250
    %v1348 = vadd.f32 %v1156, 0.0
    %v1349 = vadd.f32 %v375, %v1158
    %v1350 = vadd.f32 %v376, %v1157
    %v1351 = vadd.f32 %v1159, 0.0
    %v1352 = vadd.f32 %v377, %v1161
    %v1353 = vadd.f32 %v378, %v1160
    %v1354 = vadd.f32 %v1162, 0.0
    %v1355 = vadd.f32 %v379, %v1164
    %v1356 = vadd.f32 %v380, %v1163
    %v1357 = vadd.f32 %v1165, 0.0
    %v1358 = vadd.f32 %v381, %v1167
    %v1359 = vadd.f32 %v382, %v1166
    %v1360 = vadd.f32 %v1168, 0.0
    %v1361 = vadd.f32 %v383, %v1170
    %v1362 = vadd.f32 %v384, %v1169
    %v1363 = vadd.f32 %v1171, 0.0
    %v1364 = vadd.f32 %v385, %v1173
    %v1365 = vadd.f32 %v386, %v1172
    %v1366 = vadd.f32 %v1174, 0.0
    %v1367 = vadd.f32 %v387, %v1176
    %v1368 = vadd.f32 %v388, %v1175
    %v1369 = vadd.f32 %v1177, 0.0
    %v1370 = vadd.f32 %v389, %v1179
    %v1371 = vadd.f32 %v390, %v1178
    %v1372 = vadd.f32 %v1180, 0.0
    %v1373 = vadd.f32 %v391, %v1182
    %v1374 = vadd.f32 %v392, %v1181
    %v1375 = vadd.f32 %v1183, 0.0
    %v1376 = vadd.f32 %v393, %v1185
    %v1377 = vadd.f32 %v394, %v1184
    %v1378 = vadd.f32 %v1186, 0.0
    %v1379 = vadd.f32 %v395, %v1188
    %v1380 = vadd.f32 %v396, %v1187
    %v1381 = vadd.f32 %v1189, 0.0
    %v1382 = vadd.f32 %v397, %v1191
    %v1383 = vadd.f32 %v398, %v1190
    %v1384 = vadd.f32 %v1192, 0.0
    %v1385 = vadd.f32 %v399, %v1194
    %v1386 = vadd.f32 %v400, %v1193
    %v1387 = vadd.f32 %v1195, 0.0
    %v1388 = vadd.f32 %v401, %v1197
    %v1389 = vadd.f32 %v402, %v1196
    %v1390 = vadd.f32 %v1198, 0.0
    %v1391 = vadd.f32 %v403, %v1200
    %v1392 = vadd.f32 %v404, %v1199
    %v1393 = vadd.f32 %v1201, 0.0
    %v1394 = vadd.f32 %v405, %v1203
    %v1395 = vadd.f32 %v406, %v1202
    %v1396 = vadd.f32 %v1204, 0.0
    %v1397 = vadd.f32 %v407, %v1206
    %v1398 = vadd.f32 %v408, %v1205
    %v1399 = vadd.f32 %v1207, 0.0
    %v1400 = vadd.f32 %v409, %v1209
    %v1401 = vadd.f32 %v410, %v1208
    %v1402 = vadd.f32 %v1210, 0.0
    %v1403 = vadd.f32 %v411, %v1212
    %v1404 = vadd.f32 %v412, %v1211
    %v1405 = vadd.f32 %v1213, 0.0
    %v1406 = vadd.f32 %v413, %v1215
    %v1407 = vadd.f32 %v414, %v1214
    %v1408 = vadd.f32 %v1216, 0.0
    %v1409 = vadd.f32 %v415, %v1218
    %v1410 = vadd.f32 %v416, %v1217
    %v1411 = vadd.f32 %v1219, 0.0
    %v1412 = vadd.f32 %v417, %v1221
    %v1413 = vadd.f32 %v418, %v1220
    %v1414 = vadd.f32 %v1222, 0.0
    %v1415 = vadd.f32 %v419, %v1224
    %v1416 = vadd.f32 %v420, %v1223
    %v1417 = vadd.f32 %v1225, 0.0
    %v1418 = vadd.f32 %v421, %v1227
    %v1419 = vadd.f32 %v422, %v1226
    %v1420 = vadd.f32 %v1228, 0.0
    %v1421 = vadd.f32 %v423, %v1230
    %v1422 = vadd.f32 %v424, %v1229
    %v1423 = vadd.f32 %v1231, 0.0
    %v1424 = vadd.f32 %v425, %v1233
    %v1425 = vadd.f32 %v426, %v1232
    %v1426 = vadd.f32 %v1234, 0.0
    %v1427 = vadd.f32 %v427, %v1236
    %v1428 = vadd.f32 %v428, %v1235
    %v1429 = vadd.f32 %v1237, 0.0
    %v1430 = vadd.f32 %v429, %v1239
    %v1431 = vadd.f32 %v430, %v1238
    %v1432 = vadd.f32 %v1240, 0.0
    %v1433 = vadd.f32 %v431, %v1242
    %v1434 = vadd.f32 %v432, %v1241
    %v1435 = vadd.f32 %v1243, 0.0
    %v1436 = vadd.f32 %v433, %v1245
    %v1437 = vadd.f32 %v434, %v1244
    %v1438 = vadd.f32 %v1246, 0.0
    %v1439 = vadd.f32 %v435, %v1248
    %v1440 = vadd.f32 %v436, %v1247
    %v1441 = vadd.f32 %v1249, 0.0
    %v1442 = vadd.f32 %v437, %v1251
    %v1443 = vadd.f32 %v438, %v1250
    %vm1509 = vcmask 1045504
    %v1510 = vrot.slane %v1027, 2
    %v1511 = vrot.slane %v1028, 2
    %v1512 = vsel %vm1509, %v1510, %v1511
    %v1513 = vrot.slane 0.0, 2
    %v1514 = vsel %vm1509, %v1511, %v1513
    %v1515 = vrot.slane %v1029, 2
    %v1516 = vrot.slane %v1030, 2
    %v1517 = vsel %vm1509, %v1515, %v1516
    %v1518 = vsel %vm1509, %v1516, %v1513
    %v1519 = vrot.slane %v1031, 2
    %v1520 = vrot.slane %v1032, 2
    %v1521 = vsel %vm1509, %v1519, %v1520
    %v1522 = vsel %vm1509, %v1520, %v1513
    %v1523 = vrot.slane %v1033, 2
    %v1524 = vrot.slane %v1034, 2
    %v1525 = vsel %vm1509, %v1523, %v1524
    %v1526 = vsel %vm1509, %v1524, %v1513
    %v1527 = vrot.slane %v1035, 2
    %v1528 = vrot.slane %v1036, 2
    %v1529 = vsel %vm1509, %v1527, %v1528
    %v1530 = vsel %vm1509, %v1528, %v1513
    %v1531 = vrot.slane %v1037, 2
    %v1532 = vrot.slane %v1038, 2
    %v1533 = vsel %vm1509, %v1531, %v1532
    %v1534 = vsel %vm1509, %v1532, %v1513
    %v1535 = vrot.slane %v1039, 2
    %v1536 = vrot.slane %v1040, 2
    %v1537 = vsel %vm1509, %v1535, %v1536
    %v1538 = vsel %vm1509, %v1536, %v1513
    %v1539 = vrot.slane %v1041, 2
    %v1540 = vrot.slane %v1042, 2
    %v1541 = vsel %vm1509, %v1539, %v1540
    %v1542 = vsel %vm1509, %v1540, %v1513
    %v1543 = vrot.slane %v1043, 2
    %v1544 = vrot.slane %v1044, 2
    %v1545 = vsel %vm1509, %v1543, %v1544
    %v1546 = vsel %vm1509, %v1544, %v1513
    %v1547 = vrot.slane %v1045, 2
    %v1548 = vrot.slane %v1046, 2
    %v1549 = vsel %vm1509, %v1547, %v1548
    %v1550 = vsel %vm1509, %v1548, %v1513
    %v1551 = vrot.slane %v1047, 2
    %v1552 = vrot.slane %v1048, 2
    %v1553 = vsel %vm1509, %v1551, %v1552
    %v1554 = vsel %vm1509, %v1552, %v1513
    %v1555 = vrot.slane %v1049, 2
    %v1556 = vrot.slane %v1050, 2
    %v1557 = vsel %vm1509, %v1555, %v1556
    %v1558 = vsel %vm1509, %v1556, %v1513
    %v1559 = vrot.slane %v1051, 2
    %v1560 = vrot.slane %v1052, 2
    %v1561 = vsel %vm1509, %v1559, %v1560
    %v1562 = vsel %vm1509, %v1560, %v1513
    %v1563 = vrot.slane %v1053, 2
    %v1564 = vrot.slane %v1054, 2
    %v1565 = vsel %vm1509, %v1563, %v1564
    %v1566 = vsel %vm1509, %v1564, %v1513
    %v1567 = vrot.slane %v1055, 2
    %v1568 = vrot.slane %v1056, 2
    %v1569 = vsel %vm1509, %v1567, %v1568
    %v1570 = vsel %vm1509, %v1568, %v1513
    %v1571 = vrot.slane %v1057, 2
    %v1572 = vrot.slane %v1058, 2
    %v1573 = vsel %vm1509, %v1571, %v1572
    %v1574 = vsel %vm1509, %v1572, %v1513
    %v1575 = vrot.slane %v1059, 2
    %v1576 = vrot.slane %v1060, 2
    %v1577 = vsel %vm1509, %v1575, %v1576
    %v1578 = vsel %vm1509, %v1576, %v1513
    %v1579 = vrot.slane %v1061, 2
    %v1580 = vrot.slane %v1062, 2
    %v1581 = vsel %vm1509, %v1579, %v1580
    %v1582 = vsel %vm1509, %v1580, %v1513
    %v1583 = vrot.slane %v1063, 2
    %v1584 = vrot.slane %v1064, 2
    %v1585 = vsel %vm1509, %v1583, %v1584
    %v1586 = vsel %vm1509, %v1584, %v1513
    %v1587 = vrot.slane %v1065, 2
    %v1588 = vrot.slane %v1066, 2
    %v1589 = vsel %vm1509, %v1587, %v1588
    %v1590 = vsel %vm1509, %v1588, %v1513
    %v1591 = vrot.slane %v1067, 2
    %v1592 = vrot.slane %v1068, 2
    %v1593 = vsel %vm1509, %v1591, %v1592
    %v1594 = vsel %vm1509, %v1592, %v1513
    %v1595 = vrot.slane %v1069, 2
    %v1596 = vrot.slane %v1070, 2
    %v1597 = vsel %vm1509, %v1595, %v1596
    %v1598 = vsel %vm1509, %v1596, %v1513
    %v1599 = vrot.slane %v1071, 2
    %v1600 = vrot.slane %v1072, 2
    %v1601 = vsel %vm1509, %v1599, %v1600
    %v1602 = vsel %vm1509, %v1600, %v1513
    %v1603 = vrot.slane %v1073, 2
    %v1604 = vrot.slane %v1074, 2
    %v1605 = vsel %vm1509, %v1603, %v1604
    %v1606 = vsel %vm1509, %v1604, %v1513
    %v1607 = vrot.slane %v1075, 2
    %v1608 = vrot.slane %v1076, 2
    %v1609 = vsel %vm1509, %v1607, %v1608
    %v1610 = vsel %vm1509, %v1608, %v1513
    %v1611 = vrot.slane %v1077, 2
    %v1612 = vrot.slane %v1078, 2
    %v1613 = vsel %vm1509, %v1611, %v1612
    %v1614 = vsel %vm1509, %v1612, %v1513
    %v1615 = vrot.slane %v1079, 2
    %v1616 = vrot.slane %v1080, 2
    %v1617 = vsel %vm1509, %v1615, %v1616
    %v1618 = vsel %vm1509, %v1616, %v1513
    %v1619 = vrot.slane %v1081, 2
    %v1620 = vrot.slane %v1082, 2
    %v1621 = vsel %vm1509, %v1619, %v1620
    %v1622 = vsel %vm1509, %v1620, %v1513
    %v1623 = vrot.slane %v1083, 2
    %v1624 = vrot.slane %v1084, 2
    %v1625 = vsel %vm1509, %v1623, %v1624
    %v1626 = vsel %vm1509, %v1624, %v1513
    %v1627 = vrot.slane %v1085, 2
    %v1628 = vrot.slane %v1086, 2
    %v1629 = vsel %vm1509, %v1627, %v1628
    %v1630 = vsel %vm1509, %v1628, %v1513
    %v1631 = vrot.slane %v1087, 2
    %v1632 = vrot.slane %v1088, 2
    %v1633 = vsel %vm1509, %v1631, %v1632
    %v1634 = vsel %vm1509, %v1632, %v1513
    %v1635 = vrot.slane %v1089, 2
    %v1636 = vrot.slane %v1090, 2
    %v1637 = vsel %vm1509, %v1635, %v1636
    %v1638 = vsel %vm1509, %v1636, %v1513
    %v1735 = vadd.f32 %v1348, %v1510
    %v1736 = vadd.f32 %v1349, %v1512
    %v1737 = vadd.f32 %v1350, %v1514
    %v1738 = vadd.f32 %v1351, %v1515
    %v1739 = vadd.f32 %v1352, %v1517
    %v1740 = vadd.f32 %v1353, %v1518
    %v1741 = vadd.f32 %v1354, %v1519
    %v1742 = vadd.f32 %v1355, %v1521
    %v1743 = vadd.f32 %v1356, %v1522
    %v1744 = vadd.f32 %v1357, %v1523
    %v1745 = vadd.f32 %v1358, %v1525
    %v1746 = vadd.f32 %v1359, %v1526
    %v1747 = vadd.f32 %v1360, %v1527
    %v1748 = vadd.f32 %v1361, %v1529
    %v1749 = vadd.f32 %v1362, %v1530
    %v1750 = vadd.f32 %v1363, %v1531
    %v1751 = vadd.f32 %v1364, %v1533
    %v1752 = vadd.f32 %v1365, %v1534
    %v1753 = vadd.f32 %v1366, %v1535
    %v1754 = vadd.f32 %v1367, %v1537
    %v1755 = vadd.f32 %v1368, %v1538
    %v1756 = vadd.f32 %v1369, %v1539
    %v1757 = vadd.f32 %v1370, %v1541
    %v1758 = vadd.f32 %v1371, %v1542
    %v1759 = vadd.f32 %v1372, %v1543
    %v1760 = vadd.f32 %v1373, %v1545
    %v1761 = vadd.f32 %v1374, %v1546
    %v1762 = vadd.f32 %v1375, %v1547
    %v1763 = vadd.f32 %v1376, %v1549
    %v1764 = vadd.f32 %v1377, %v1550
    %v1765 = vadd.f32 %v1378, %v1551
    %v1766 = vadd.f32 %v1379, %v1553
    %v1767 = vadd.f32 %v1380, %v1554
    %v1768 = vadd.f32 %v1381, %v1555
    %v1769 = vadd.f32 %v1382, %v1557
    %v1770 = vadd.f32 %v1383, %v1558
    %v1771 = vadd.f32 %v1384, %v1559
    %v1772 = vadd.f32 %v1385, %v1561
    %v1773 = vadd.f32 %v1386, %v1562
    %v1774 = vadd.f32 %v1387, %v1563
    %v1775 = vadd.f32 %v1388, %v1565
    %v1776 = vadd.f32 %v1389, %v1566
    %v1777 = vadd.f32 %v1390, %v1567
    %v1778 = vadd.f32 %v1391, %v1569
    %v1779 = vadd.f32 %v1392, %v1570
    %v1780 = vadd.f32 %v1393, %v1571
    %v1781 = vadd.f32 %v1394, %v1573
    %v1782 = vadd.f32 %v1395, %v1574
    %v1783 = vadd.f32 %v1396, %v1575
    %v1784 = vadd.f32 %v1397, %v1577
    %v1785 = vadd.f32 %v1398, %v1578
    %v1786 = vadd.f32 %v1399, %v1579
    %v1787 = vadd.f32 %v1400, %v1581
    %v1788 = vadd.f32 %v1401, %v1582
    %v1789 = vadd.f32 %v1402, %v1583
    %v1790 = vadd.f32 %v1403, %v1585
    %v1791 = vadd.f32 %v1404, %v1586
    %v1792 = vadd.f32 %v1405, %v1587
    %v1793 = vadd.f32 %v1406, %v1589
    %v1794 = vadd.f32 %v1407, %v1590
    %v1795 = vadd.f32 %v1408, %v1591
    %v1796 = vadd.f32 %v1409, %v1593
    %v1797 = vadd.f32 %v1410, %v1594
    %v1798 = vadd.f32 %v1411, %v1595
    %v1799 = vadd.f32 %v1412, %v1597
    %v1800 = vadd.f32 %v1413, %v1598
    %v1801 = vadd.f32 %v1414, %v1599
    %v1802 = vadd.f32 %v1415, %v1601
    %v1803 = vadd.f32 %v1416, %v1602
    %v1804 = vadd.f32 %v1417, %v1603
    %v1805 = vadd.f32 %v1418, %v1605
    %v1806 = vadd.f32 %v1419, %v1606
    %v1807 = vadd.f32 %v1420, %v1607
    %v1808 = vadd.f32 %v1421, %v1609
    %v1809 = vadd.f32 %v1422, %v1610
    %v1810 = vadd.f32 %v1423, %v1611
    %v1811 = vadd.f32 %v1424, %v1613
    %v1812 = vadd.f32 %v1425, %v1614
    %v1813 = vadd.f32 %v1426, %v1615
    %v1814 = vadd.f32 %v1427, %v1617
    %v1815 = vadd.f32 %v1428, %v1618
    %v1816 = vadd.f32 %v1429, %v1619
    %v1817 = vadd.f32 %v1430, %v1621
    %v1818 = vadd.f32 %v1431, %v1622
    %v1819 = vadd.f32 %v1432, %v1623
    %v1820 = vadd.f32 %v1433, %v1625
    %v1821 = vadd.f32 %v1434, %v1626
    %v1822 = vadd.f32 %v1435, %v1627
    %v1823 = vadd.f32 %v1436, %v1629
    %v1824 = vadd.f32 %v1437, %v1630
    %v1825 = vadd.f32 %v1438, %v1631
    %v1826 = vadd.f32 %v1439, %v1633
    %v1827 = vadd.f32 %v1440, %v1634
    %v1828 = vadd.f32 %v1441, %v1635
    %v1829 = vadd.f32 %v1442, %v1637
    %v1830 = vadd.f32 %v1443, %v1638
    %vm1927 = vcmask 1040384
    %v1928 = vrot.slane %v1735, 7
    %v1929 = vrot.slane %v1736, 7
    %v1930 = vsel %vm1927, %v1928, %v1929
    %v1931 = vrot.slane %v1737, 7
    %v1932 = vsel %vm1927, %v1929, %v1931
    %v1933 = vrot.slane %v1738, 7
    %v1934 = vrot.slane %v1739, 7
    %v1935 = vsel %vm1927, %v1933, %v1934
    %v1936 = vrot.slane %v1740, 7
    %v1937 = vsel %vm1927, %v1934, %v1936
    %v1938 = vrot.slane %v1741, 7
    %v1939 = vrot.slane %v1742, 7
    %v1940 = vsel %vm1927, %v1938, %v1939
    %v1941 = vrot.slane %v1743, 7
    %v1942 = vsel %vm1927, %v1939, %v1941
    %v1943 = vrot.slane %v1744, 7
    %v1944 = vrot.slane %v1745, 7
    %v1945 = vsel %vm1927, %v1943, %v1944
    %v1946 = vrot.slane %v1746, 7
    %v1947 = vsel %vm1927, %v1944, %v1946
    %v1948 = vrot.slane %v1747, 7
    %v1949 = vrot.slane %v1748, 7
    %v1950 = vsel %vm1927, %v1948, %v1949
    %v1951 = vrot.slane %v1749, 7
    %v1952 = vsel %vm1927, %v1949, %v1951
    %v1953 = vrot.slane %v1750, 7
    %v1954 = vrot.slane %v1751, 7
    %v1955 = vsel %vm1927, %v1953, %v1954
    %v1956 = vrot.slane %v1752, 7
    %v1957 = vsel %vm1927, %v1954, %v1956
    %v1958 = vrot.slane %v1753, 7
    %v1959 = vrot.slane %v1754, 7
    %v1960 = vsel %vm1927, %v1958, %v1959
    %v1961 = vrot.slane %v1755, 7
    %v1962 = vsel %vm1927, %v1959, %v1961
    %v1963 = vrot.slane %v1756, 7
    %v1964 = vrot.slane %v1757, 7
    %v1965 = vsel %vm1927, %v1963, %v1964
    %v1966 = vrot.slane %v1758, 7
    %v1967 = vsel %vm1927, %v1964, %v1966
    %v1968 = vrot.slane %v1759, 7
    %v1969 = vrot.slane %v1760, 7
    %v1970 = vsel %vm1927, %v1968, %v1969
    %v1971 = vrot.slane %v1761, 7
    %v1972 = vsel %vm1927, %v1969, %v1971
    %v1973 = vrot.slane %v1762, 7
    %v1974 = vrot.slane %v1763, 7
    %v1975 = vsel %vm1927, %v1973, %v1974
    %v1976 = vrot.slane %v1764, 7
    %v1977 = vsel %vm1927, %v1974, %v1976
    %v1978 = vrot.slane %v1765, 7
    %v1979 = vrot.slane %v1766, 7
    %v1980 = vsel %vm1927, %v1978, %v1979
    %v1981 = vrot.slane %v1767, 7
    %v1982 = vsel %vm1927, %v1979, %v1981
    %v1983 = vrot.slane %v1768, 7
    %v1984 = vrot.slane %v1769, 7
    %v1985 = vsel %vm1927, %v1983, %v1984
    %v1986 = vrot.slane %v1770, 7
    %v1987 = vsel %vm1927, %v1984, %v1986
    %v1988 = vrot.slane %v1771, 7
    %v1989 = vrot.slane %v1772, 7
    %v1990 = vsel %vm1927, %v1988, %v1989
    %v1991 = vrot.slane %v1773, 7
    %v1992 = vsel %vm1927, %v1989, %v1991
    %v1993 = vrot.slane %v1774, 7
    %v1994 = vrot.slane %v1775, 7
    %v1995 = vsel %vm1927, %v1993, %v1994
    %v1996 = vrot.slane %v1776, 7
    %v1997 = vsel %vm1927, %v1994, %v1996
    %v1998 = vrot.slane %v1777, 7
    %v1999 = vrot.slane %v1778, 7
    %v2000 = vsel %vm1927, %v1998, %v1999
    %v2001 = vrot.slane %v1779, 7
    %v2002 = vsel %vm1927, %v1999, %v2001
    %v2003 = vrot.slane %v1780, 7
    %v2004 = vrot.slane %v1781, 7
    %v2005 = vsel %vm1927, %v2003, %v2004
    %v2006 = vrot.slane %v1782, 7
    %v2007 = vsel %vm1927, %v2004, %v2006
    %v2008 = vrot.slane %v1783, 7
    %v2009 = vrot.slane %v1784, 7
    %v2010 = vsel %vm1927, %v2008, %v2009
    %v2011 = vrot.slane %v1785, 7
    %v2012 = vsel %vm1927, %v2009, %v2011
    %v2013 = vrot.slane %v1786, 7
    %v2014 = vrot.slane %v1787, 7
    %v2015 = vsel %vm1927, %v2013, %v2014
    %v2016 = vrot.slane %v1788, 7
    %v2017 = vsel %vm1927, %v2014, %v2016
    %v2018 = vrot.slane %v1789, 7
    %v2019 = vrot.slane %v1790, 7
    %v2020 = vsel %vm1927, %v2018, %v2019
    %v2021 = vrot.slane %v1791, 7
    %v2022 = vsel %vm1927, %v2019, %v2021
    %v2023 = vrot.slane %v1792, 7
    %v2024 = vrot.slane %v1793, 7
    %v2025 = vsel %vm1927, %v2023, %v2024
    %v2026 = vrot.slane %v1794, 7
    %v2027 = vsel %vm1927, %v2024, %v2026
    %v2028 = vrot.slane %v1795, 7
    %v2029 = vrot.slane %v1796, 7
    %v2030 = vsel %vm1927, %v2028, %v2029
    %v2031 = vrot.slane %v1797, 7
    %v2032 = vsel %vm1927, %v2029, %v2031
    %v2033 = vrot.slane %v1798, 7
    %v2034 = vrot.slane %v1799, 7
    %v2035 = vsel %vm1927, %v2033, %v2034
    %v2036 = vrot.slane %v1800, 7
    %v2037 = vsel %vm1927, %v2034, %v2036
    %v2038 = vrot.slane %v1801, 7
    %v2039 = vrot.slane %v1802, 7
    %v2040 = vsel %vm1927, %v2038, %v2039
    %v2041 = vrot.slane %v1803, 7
    %v2042 = vsel %vm1927, %v2039, %v2041
    %v2043 = vrot.slane %v1804, 7
    %v2044 = vrot.slane %v1805, 7
    %v2045 = vsel %vm1927, %v2043, %v2044
    %v2046 = vrot.slane %v1806, 7
    %v2047 = vsel %vm1927, %v2044, %v2046
    %v2048 = vrot.slane %v1807, 7
    %v2049 = vrot.slane %v1808, 7
    %v2050 = vsel %vm1927, %v2048, %v2049
    %v2051 = vrot.slane %v1809, 7
    %v2052 = vsel %vm1927, %v2049, %v2051
    %v2053 = vrot.slane %v1810, 7
    %v2054 = vrot.slane %v1811, 7
    %v2055 = vsel %vm1927, %v2053, %v2054
    %v2056 = vrot.slane %v1812, 7
    %v2057 = vsel %vm1927, %v2054, %v2056
    %v2058 = vrot.slane %v1813, 7
    %v2059 = vrot.slane %v1814, 7
    %v2060 = vsel %vm1927, %v2058, %v2059
    %v2061 = vrot.slane %v1815, 7
    %v2062 = vsel %vm1927, %v2059, %v2061
    %v2063 = vrot.slane %v1816, 7
    %v2064 = vrot.slane %v1817, 7
    %v2065 = vsel %vm1927, %v2063, %v2064
    %v2066 = vrot.slane %v1818, 7
    %v2067 = vsel %vm1927, %v2064, %v2066
    %v2068 = vrot.slane %v1819, 7
    %v2069 = vrot.slane %v1820, 7
    %v2070 = vsel %vm1927, %v2068, %v2069
    %v2071 = vrot.slane %v1821, 7
    %v2072 = vsel %vm1927, %v2069, %v2071
    %v2073 = vrot.slane %v1822, 7
    %v2074 = vrot.slane %v1823, 7
    %v2075 = vsel %vm1927, %v2073, %v2074
    %v2076 = vrot.slane %v1824, 7
    %v2077 = vsel %vm1927, %v2074, %v2076
    %v2078 = vrot.slane %v1825, 7
    %v2079 = vrot.slane %v1826, 7
    %v2080 = vsel %vm1927, %v2078, %v2079
    %v2081 = vrot.slane %v1827, 7
    %v2082 = vsel %vm1927, %v2079, %v2081
    %v2083 = vrot.slane %v1828, 7
    %v2084 = vrot.slane %v1829, 7
    %v2085 = vsel %vm1927, %v2083, %v2084
    %v2086 = vrot.slane %v1830, 7
    %v2087 = vsel %vm1927, %v2084, %v2086
    %v2152 = vadd.f32 %v1930, %v1932
    %v2153 = vadd.f32 %v2152, %v1935
    %v2154 = vadd.f32 %v2153, %v1937
    %v2155 = vadd.f32 %v2154, %v1940
    %v2156 = vadd.f32 %v2155, %v1942
    %v2157 = vadd.f32 %v2156, %v1945
    %v2158 = vadd.f32 %v2157, %v1947
    %v2159 = vadd.f32 %v2158, %v1950
    %v2160 = vadd.f32 %v2159, %v1952
    %v2161 = vadd.f32 %v2160, %v1955
    %v2162 = vadd.f32 %v2161, %v1957
    %v2163 = vadd.f32 %v2162, %v1960
    %v2164 = vadd.f32 %v2163, %v1962
    %v2165 = vadd.f32 %v2164, %v1965
    %v2166 = vadd.f32 %v2165, %v1967
    %v2167 = vadd.f32 %v2166, %v1970
    %v2168 = vadd.f32 %v2167, %v1972
    %v2169 = vadd.f32 %v2168, %v1975
    %v2170 = vadd.f32 %v2169, %v1977
    %v2171 = vadd.f32 %v2170, %v1980
    %v2172 = vadd.f32 %v2171, %v1982
    %v2173 = vadd.f32 %v2172, %v1985
    %v2174 = vadd.f32 %v2173, %v1987
    %v2175 = vadd.f32 %v2174, %v1990
    %v2176 = vadd.f32 %v2175, %v1992
    %v2177 = vadd.f32 %v2176, %v1995
    %v2178 = vadd.f32 %v2177, %v1997
    %v2179 = vadd.f32 %v2178, %v2000
    %v2180 = vadd.f32 %v2179, %v2002
    %v2181 = vadd.f32 %v2180, %v2005
    %v2182 = vadd.f32 %v2181, %v2007
    %v2183 = vadd.f32 %v2182, %v2010
    %v2184 = vadd.f32 %v2183, %v2012
    %v2185 = vadd.f32 %v2184, %v2015
    %v2186 = vadd.f32 %v2185, %v2017
    %v2187 = vadd.f32 %v2186, %v2020
    %v2188 = vadd.f32 %v2187, %v2022
    %v2189 = vadd.f32 %v2188, %v2025
    %v2190 = vadd.f32 %v2189, %v2027
    %v2191 = vadd.f32 %v2190, %v2030
    %v2192 = vadd.f32 %v2191, %v2032
    %v2193 = vadd.f32 %v2192, %v2035
    %v2194 = vadd.f32 %v2193, %v2037
    %v2195 = vadd.f32 %v2194, %v2040
    %v2196 = vadd.f32 %v2195, %v2042
    %v2197 = vadd.f32 %v2196, %v2045
    %v2198 = vadd.f32 %v2197, %v2047
    %v2199 = vadd.f32 %v2198, %v2050
    %v2200 = vadd.f32 %v2199, %v2052
    %v2201 = vadd.f32 %v2200, %v2055
    %v2202 = vadd.f32 %v2201, %v2057
    %v2203 = vadd.f32 %v2202, %v2060
    %v2204 = vadd.f32 %v2203, %v2062
    %v2205 = vadd.f32 %v2204, %v2065
    %v2206 = vadd.f32 %v2205, %v2067
    %v2207 = vadd.f32 %v2206, %v2070
    %v2208 = vadd.f32 %v2207, %v2072
    %v2209 = vadd.f32 %v2208, %v2075
    %v2210 = vadd.f32 %v2209, %v2077
    %v2211 = vadd.f32 %v2210, %v2080
    %v2212 = vadd.f32 %v2211, %v2082
    %v2213 = vadd.f32 %v2212, %v2085
    %v2214 = vadd.f32 %v2213, %v2087
    %v2215 = vrot.slane %v2214, 4
    %v2216 = vadd.f32 %v2214, %v2215
    %v2217 = vrot.slane %v2216, 2
    %v2218 = vadd.f32 %v2216, %v2217
    %v2219 = vrot.slane %v2218, 1
    %v2220 = vadd.f32 %v2218, %v2219
    %v2221 = vrcp.pop 512.0
    %v2222 = vmul.f32 %v2220, %v2221
    %v2223 = vsub.f32 %v1735, %v2222
    %v2224 = vsub.f32 %v1736, %v2222
    %v2225 = vsub.f32 %v1737, %v2222
    %v2226 = vsub.f32 %v1738, %v2222
    %v2227 = vsub.f32 %v1739, %v2222
    %v2228 = vsub.f32 %v1740, %v2222
    %v2229 = vsub.f32 %v1741, %v2222
    %v2230 = vsub.f32 %v1742, %v2222
    %v2231 = vsub.f32 %v1743, %v2222
    %v2232 = vsub.f32 %v1744, %v2222
    %v2233 = vsub.f32 %v1745, %v2222
    %v2234 = vsub.f32 %v1746, %v2222
    %v2235 = vsub.f32 %v1747, %v2222
    %v2236 = vsub.f32 %v1748, %v2222
    %v2237 = vsub.f32 %v1749, %v2222
    %v2238 = vsub.f32 %v1750, %v2222
    %v2239 = vsub.f32 %v1751, %v2222
    %v2240 = vsub.f32 %v1752, %v2222
    %v2241 = vsub.f32 %v1753, %v2222
    %v2242 = vsub.f32 %v1754, %v2222
    %v2243 = vsub.f32 %v1755, %v2222
    %v2244 = vsub.f32 %v1756, %v2222
    %v2245 = vsub.f32 %v1757, %v2222
    %v2246 = vsub.f32 %v1758, %v2222
    %v2247 = vsub.f32 %v1759, %v2222
    %v2248 = vsub.f32 %v1760, %v2222
    %v2249 = vsub.f32 %v1761, %v2222
    %v2250 = vsub.f32 %v1762, %v2222
    %v2251 = vsub.f32 %v1763, %v2222
    %v2252 = vsub.f32 %v1764, %v2222
    %v2253 = vsub.f32 %v1765, %v2222
    %v2254 = vsub.f32 %v1766, %v2222
    %v2255 = vsub.f32 %v1767, %v2222
    %v2256 = vsub.f32 %v1768, %v2222
    %v2257 = vsub.f32 %v1769, %v2222
    %v2258 = vsub.f32 %v1770, %v2222
    %v2259 = vsub.f32 %v1771, %v2222
    %v2260 = vsub.f32 %v1772, %v2222
    %v2261 = vsub.f32 %v1773, %v2222
    %v2262 = vsub.f32 %v1774, %v2222
    %v2263 = vsub.f32 %v1775, %v2222
    %v2264 = vsub.f32 %v1776, %v2222
    %v2265 = vsub.f32 %v1777, %v2222
    %v2266 = vsub.f32 %v1778, %v2222
    %v2267 = vsub.f32 %v1779, %v2222
    %v2268 = vsub.f32 %v1780, %v2222
    %v2269 = vsub.f32 %v1781, %v2222
    %v2270 = vsub.f32 %v1782, %v2222
    %v2271 = vsub.f32 %v1783, %v2222
    %v2272 = vsub.f32 %v1784, %v2222
    %v2273 = vsub.f32 %v1785, %v2222
    %v2274 = vsub.f32 %v1786, %v2222
    %v2275 = vsub.f32 %v1787, %v2222
    %v2276 = vsub.f32 %v1788, %v2222
    %v2277 = vsub.f32 %v1789, %v2222
    %v2278 = vsub.f32 %v1790, %v2222
    %v2279 = vsub.f32 %v1791, %v2222
    %v2280 = vsub.f32 %v1792, %v2222
    %v2281 = vsub.f32 %v1793, %v2222
    %v2282 = vsub.f32 %v1794, %v2222
    %v2283 = vsub.f32 %v1795, %v2222
    %v2284 = vsub.f32 %v1796, %v2222
    %v2285 = vsub.f32 %v1797, %v2222
    %v2286 = vsub.f32 %v1798, %v2222
    %v2287 = vsub.f32 %v1799, %v2222
    %v2288 = vsub.f32 %v1800, %v2222
    %v2289 = vsub.f32 %v1801, %v2222
    %v2290 = vsub.f32 %v1802, %v2222
    %v2291 = vsub.f32 %v1803, %v2222
    %v2292 = vsub.f32 %v1804, %v2222
    %v2293 = vsub.f32 %v1805, %v2222
    %v2294 = vsub.f32 %v1806, %v2222
    %v2295 = vsub.f32 %v1807, %v2222
    %v2296 = vsub.f32 %v1808, %v2222
    %v2297 = vsub.f32 %v1809, %v2222
    %v2298 = vsub.f32 %v1810, %v2222
    %v2299 = vsub.f32 %v1811, %v2222
    %v2300 = vsub.f32 %v1812, %v2222
    %v2301 = vsub.f32 %v1813, %v2222
    %v2302 = vsub.f32 %v1814, %v2222
    %v2303 = vsub.f32 %v1815, %v2222
    %v2304 = vsub.f32 %v1816, %v2222
    %v2305 = vsub.f32 %v1817, %v2222
    %v2306 = vsub.f32 %v1818, %v2222
    %v2307 = vsub.f32 %v1819, %v2222
    %v2308 = vsub.f32 %v1820, %v2222
    %v2309 = vsub.f32 %v1821, %v2222
    %v2310 = vsub.f32 %v1822, %v2222
    %v2311 = vsub.f32 %v1823, %v2222
    %v2312 = vsub.f32 %v1824, %v2222
    %v2313 = vsub.f32 %v1825, %v2222
    %v2314 = vsub.f32 %v1826, %v2222
    %v2315 = vsub.f32 %v1827, %v2222
    %v2316 = vsub.f32 %v1828, %v2222
    %v2317 = vsub.f32 %v1829, %v2222
    %v2318 = vsub.f32 %v1830, %v2222
    %v2319 = vmul.f32 %v2223, %v2223
    %v2320 = vmul.f32 %v2224, %v2224
    %v2321 = vmul.f32 %v2225, %v2225
    %v2322 = vmul.f32 %v2226, %v2226
    %v2323 = vmul.f32 %v2227, %v2227
    %v2324 = vmul.f32 %v2228, %v2228
    %v2325 = vmul.f32 %v2229, %v2229
    %v2326 = vmul.f32 %v2230, %v2230
    %v2327 = vmul.f32 %v2231, %v2231
    %v2328 = vmul.f32 %v2232, %v2232
    %v2329 = vmul.f32 %v2233, %v2233
    %v2330 = vmul.f32 %v2234, %v2234
    %v2331 = vmul.f32 %v2235, %v2235
    %v2332 = vmul.f32 %v2236, %v2236
    %v2333 = vmul.f32 %v2237, %v2237
    %v2334 = vmul.f32 %v2238, %v2238
    %v2335 = vmul.f32 %v2239, %v2239
    %v2336 = vmul.f32 %v2240, %v2240
    %v2337 = vmul.f32 %v2241, %v2241
    %v2338 = vmul.f32 %v2242, %v2242
    %v2339 = vmul.f32 %v2243, %v2243
    %v2340 = vmul.f32 %v2244, %v2244
    %v2341 = vmul.f32 %v2245, %v2245
    %v2342 = vmul.f32 %v2246, %v2246
    %v2343 = vmul.f32 %v2247, %v2247
    %v2344 = vmul.f32 %v2248, %v2248
    %v2345 = vmul.f32 %v2249, %v2249
    %v2346 = vmul.f32 %v2250, %v2250
    %v2347 = vmul.f32 %v2251, %v2251
    %v2348 = vmul.f32 %v2252, %v2252
    %v2349 = vmul.f32 %v2253, %v2253
    %v2350 = vmul.f32 %v2254, %v2254
    %v2351 = vmul.f32 %v2255, %v2255
    %v2352 = vmul.f32 %v2256, %v2256
    %v2353 = vmul.f32 %v2257, %v2257
    %v2354 = vmul.f32 %v2258, %v2258
    %v2355 = vmul.f32 %v2259, %v2259
    %v2356 = vmul.f32 %v2260, %v2260
    %v2357 = vmul.f32 %v2261, %v2261
    %v2358 = vmul.f32 %v2262, %v2262
    %v2359 = vmul.f32 %v2263, %v2263
    %v2360 = vmul.f32 %v2264, %v2264
    %v2361 = vmul.f32 %v2265, %v2265
    %v2362 = vmul.f32 %v2266, %v2266
    %v2363 = vmul.f32 %v2267, %v2267
    %v2364 = vmul.f32 %v2268, %v2268
    %v2365 = vmul.f32 %v2269, %v2269
    %v2366 = vmul.f32 %v2270, %v2270
    %v2367 = vmul.f32 %v2271, %v2271
    %v2368 = vmul.f32 %v2272, %v2272
    %v2369 = vmul.f32 %v2273, %v2273
    %v2370 = vmul.f32 %v2274, %v2274
    %v2371 = vmul.f32 %v2275, %v2275
    %v2372 = vmul.f32 %v2276, %v2276
    %v2373 = vmul.f32 %v2277, %v2277
    %v2374 = vmul.f32 %v2278, %v2278
    %v2375 = vmul.f32 %v2279, %v2279
    %v2376 = vmul.f32 %v2280, %v2280
    %v2377 = vmul.f32 %v2281, %v2281
    %v2378 = vmul.f32 %v2282, %v2282
    %v2379 = vmul.f32 %v2283, %v2283
    %v2380 = vmul.f32 %v2284, %v2284
    %v2381 = vmul.f32 %v2285, %v2285
    %v2382 = vmul.f32 %v2286, %v2286
    %v2383 = vmul.f32 %v2287, %v2287
    %v2384 = vmul.f32 %v2288, %v2288
    %v2385 = vmul.f32 %v2289, %v2289
    %v2386 = vmul.f32 %v2290, %v2290
    %v2387 = vmul.f32 %v2291, %v2291
    %v2388 = vmul.f32 %v2292, %v2292
    %v2389 = vmul.f32 %v2293, %v2293
    %v2390 = vmul.f32 %v2294, %v2294
    %v2391 = vmul.f32 %v2295, %v2295
    %v2392 = vmul.f32 %v2296, %v2296
    %v2393 = vmul.f32 %v2297, %v2297
    %v2394 = vmul.f32 %v2298, %v2298
    %v2395 = vmul.f32 %v2299, %v2299
    %v2396 = vmul.f32 %v2300, %v2300
    %v2397 = vmul.f32 %v2301, %v2301
    %v2398 = vmul.f32 %v2302, %v2302
    %v2399 = vmul.f32 %v2303, %v2303
    %v2400 = vmul.f32 %v2304, %v2304
    %v2401 = vmul.f32 %v2305, %v2305
    %v2402 = vmul.f32 %v2306, %v2306
    %v2403 = vmul.f32 %v2307, %v2307
    %v2404 = vmul.f32 %v2308, %v2308
    %v2405 = vmul.f32 %v2309, %v2309
    %v2406 = vmul.f32 %v2310, %v2310
    %v2407 = vmul.f32 %v2311, %v2311
    %v2408 = vmul.f32 %v2312, %v2312
    %v2409 = vmul.f32 %v2313, %v2313
    %v2410 = vmul.f32 %v2314, %v2314
    %v2411 = vmul.f32 %v2315, %v2315
    %v2412 = vmul.f32 %v2316, %v2316
    %v2413 = vmul.f32 %v2317, %v2317
    %v2414 = vmul.f32 %v2318, %v2318
    %v2511 = vrot.slane %v2319, 7
    %v2512 = vrot.slane %v2320, 7
    %v2513 = vsel %vm1927, %v2511, %v2512
    %v2514 = vrot.slane %v2321, 7
    %v2515 = vsel %vm1927, %v2512, %v2514
    %v2516 = vrot.slane %v2322, 7
    %v2517 = vrot.slane %v2323, 7
    %v2518 = vsel %vm1927, %v2516, %v2517
    %v2519 = vrot.slane %v2324, 7
    %v2520 = vsel %vm1927, %v2517, %v2519
    %v2521 = vrot.slane %v2325, 7
    %v2522 = vrot.slane %v2326, 7
    %v2523 = vsel %vm1927, %v2521, %v2522
    %v2524 = vrot.slane %v2327, 7
    %v2525 = vsel %vm1927, %v2522, %v2524
    %v2526 = vrot.slane %v2328, 7
    %v2527 = vrot.slane %v2329, 7
    %v2528 = vsel %vm1927, %v2526, %v2527
    %v2529 = vrot.slane %v2330, 7
    %v2530 = vsel %vm1927, %v2527, %v2529
    %v2531 = vrot.slane %v2331, 7
    %v2532 = vrot.slane %v2332, 7
    %v2533 = vsel %vm1927, %v2531, %v2532
    %v2534 = vrot.slane %v2333, 7
    %v2535 = vsel %vm1927, %v2532, %v2534
    %v2536 = vrot.slane %v2334, 7
    %v2537 = vrot.slane %v2335, 7
    %v2538 = vsel %vm1927, %v2536, %v2537
    %v2539 = vrot.slane %v2336, 7
    %v2540 = vsel %vm1927, %v2537, %v2539
    %v2541 = vrot.slane %v2337, 7
    %v2542 = vrot.slane %v2338, 7
    %v2543 = vsel %vm1927, %v2541, %v2542
    %v2544 = vrot.slane %v2339, 7
    %v2545 = vsel %vm1927, %v2542, %v2544
    %v2546 = vrot.slane %v2340, 7
    %v2547 = vrot.slane %v2341, 7
    %v2548 = vsel %vm1927, %v2546, %v2547
    %v2549 = vrot.slane %v2342, 7
    %v2550 = vsel %vm1927, %v2547, %v2549
    %v2551 = vrot.slane %v2343, 7
    %v2552 = vrot.slane %v2344, 7
    %v2553 = vsel %vm1927, %v2551, %v2552
    %v2554 = vrot.slane %v2345, 7
    %v2555 = vsel %vm1927, %v2552, %v2554
    %v2556 = vrot.slane %v2346, 7
    %v2557 = vrot.slane %v2347, 7
    %v2558 = vsel %vm1927, %v2556, %v2557
    %v2559 = vrot.slane %v2348, 7
    %v2560 = vsel %vm1927, %v2557, %v2559
    %v2561 = vrot.slane %v2349, 7
    %v2562 = vrot.slane %v2350, 7
    %v2563 = vsel %vm1927, %v2561, %v2562
    %v2564 = vrot.slane %v2351, 7
    %v2565 = vsel %vm1927, %v2562, %v2564
    %v2566 = vrot.slane %v2352, 7
    %v2567 = vrot.slane %v2353, 7
    %v2568 = vsel %vm1927, %v2566, %v2567
    %v2569 = vrot.slane %v2354, 7
    %v2570 = vsel %vm1927, %v2567, %v2569
    %v2571 = vrot.slane %v2355, 7
    %v2572 = vrot.slane %v2356, 7
    %v2573 = vsel %vm1927, %v2571, %v2572
    %v2574 = vrot.slane %v2357, 7
    %v2575 = vsel %vm1927, %v2572, %v2574
    %v2576 = vrot.slane %v2358, 7
    %v2577 = vrot.slane %v2359, 7
    %v2578 = vsel %vm1927, %v2576, %v2577
    %v2579 = vrot.slane %v2360, 7
    %v2580 = vsel %vm1927, %v2577, %v2579
    %v2581 = vrot.slane %v2361, 7
    %v2582 = vrot.slane %v2362, 7
    %v2583 = vsel %vm1927, %v2581, %v2582
    %v2584 = vrot.slane %v2363, 7
    %v2585 = vsel %vm1927, %v2582, %v2584
    %v2586 = vrot.slane %v2364, 7
    %v2587 = vrot.slane %v2365, 7
    %v2588 = vsel %vm1927, %v2586, %v2587
    %v2589 = vrot.slane %v2366, 7
    %v2590 = vsel %vm1927, %v2587, %v2589
    %v2591 = vrot.slane %v2367, 7
    %v2592 = vrot.slane %v2368, 7
    %v2593 = vsel %vm1927, %v2591, %v2592
    %v2594 = vrot.slane %v2369, 7
    %v2595 = vsel %vm1927, %v2592, %v2594
    %v2596 = vrot.slane %v2370, 7
    %v2597 = vrot.slane %v2371, 7
    %v2598 = vsel %vm1927, %v2596, %v2597
    %v2599 = vrot.slane %v2372, 7
    %v2600 = vsel %vm1927, %v2597, %v2599
    %v2601 = vrot.slane %v2373, 7
    %v2602 = vrot.slane %v2374, 7
    %v2603 = vsel %vm1927, %v2601, %v2602
    %v2604 = vrot.slane %v2375, 7
    %v2605 = vsel %vm1927, %v2602, %v2604
    %v2606 = vrot.slane %v2376, 7
    %v2607 = vrot.slane %v2377, 7
    %v2608 = vsel %vm1927, %v2606, %v2607
    %v2609 = vrot.slane %v2378, 7
    %v2610 = vsel %vm1927, %v2607, %v2609
    %v2611 = vrot.slane %v2379, 7
    %v2612 = vrot.slane %v2380, 7
    %v2613 = vsel %vm1927, %v2611, %v2612
    %v2614 = vrot.slane %v2381, 7
    %v2615 = vsel %vm1927, %v2612, %v2614
    %v2616 = vrot.slane %v2382, 7
    %v2617 = vrot.slane %v2383, 7
    %v2618 = vsel %vm1927, %v2616, %v2617
    %v2619 = vrot.slane %v2384, 7
    %v2620 = vsel %vm1927, %v2617, %v2619
    %v2621 = vrot.slane %v2385, 7
    %v2622 = vrot.slane %v2386, 7
    %v2623 = vsel %vm1927, %v2621, %v2622
    %v2624 = vrot.slane %v2387, 7
    %v2625 = vsel %vm1927, %v2622, %v2624
    %v2626 = vrot.slane %v2388, 7
    %v2627 = vrot.slane %v2389, 7
    %v2628 = vsel %vm1927, %v2626, %v2627
    %v2629 = vrot.slane %v2390, 7
    %v2630 = vsel %vm1927, %v2627, %v2629
    %v2631 = vrot.slane %v2391, 7
    %v2632 = vrot.slane %v2392, 7
    %v2633 = vsel %vm1927, %v2631, %v2632
    %v2634 = vrot.slane %v2393, 7
    %v2635 = vsel %vm1927, %v2632, %v2634
    %v2636 = vrot.slane %v2394, 7
    %v2637 = vrot.slane %v2395, 7
    %v2638 = vsel %vm1927, %v2636, %v2637
    %v2639 = vrot.slane %v2396, 7
    %v2640 = vsel %vm1927, %v2637, %v2639
    %v2641 = vrot.slane %v2397, 7
    %v2642 = vrot.slane %v2398, 7
    %v2643 = vsel %vm1927, %v2641, %v2642
    %v2644 = vrot.slane %v2399, 7
    %v2645 = vsel %vm1927, %v2642, %v2644
    %v2646 = vrot.slane %v2400, 7
    %v2647 = vrot.slane %v2401, 7
    %v2648 = vsel %vm1927, %v2646, %v2647
    %v2649 = vrot.slane %v2402, 7
    %v2650 = vsel %vm1927, %v2647, %v2649
    %v2651 = vrot.slane %v2403, 7
    %v2652 = vrot.slane %v2404, 7
    %v2653 = vsel %vm1927, %v2651, %v2652
    %v2654 = vrot.slane %v2405, 7
    %v2655 = vsel %vm1927, %v2652, %v2654
    %v2656 = vrot.slane %v2406, 7
    %v2657 = vrot.slane %v2407, 7
    %v2658 = vsel %vm1927, %v2656, %v2657
    %v2659 = vrot.slane %v2408, 7
    %v2660 = vsel %vm1927, %v2657, %v2659
    %v2661 = vrot.slane %v2409, 7
    %v2662 = vrot.slane %v2410, 7
    %v2663 = vsel %vm1927, %v2661, %v2662
    %v2664 = vrot.slane %v2411, 7
    %v2665 = vsel %vm1927, %v2662, %v2664
    %v2666 = vrot.slane %v2412, 7
    %v2667 = vrot.slane %v2413, 7
    %v2668 = vsel %vm1927, %v2666, %v2667
    %v2669 = vrot.slane %v2414, 7
    %v2670 = vsel %vm1927, %v2667, %v2669
    %v2735 = vadd.f32 %v2513, %v2515
    %v2736 = vadd.f32 %v2735, %v2518
    %v2737 = vadd.f32 %v2736, %v2520
    %v2738 = vadd.f32 %v2737, %v2523
    %v2739 = vadd.f32 %v2738, %v2525
    %v2740 = vadd.f32 %v2739, %v2528
    %v2741 = vadd.f32 %v2740, %v2530
    %v2742 = vadd.f32 %v2741, %v2533
    %v2743 = vadd.f32 %v2742, %v2535
    %v2744 = vadd.f32 %v2743, %v2538
    %v2745 = vadd.f32 %v2744, %v2540
    %v2746 = vadd.f32 %v2745, %v2543
    %v2747 = vadd.f32 %v2746, %v2545
    %v2748 = vadd.f32 %v2747, %v2548
    %v2749 = vadd.f32 %v2748, %v2550
    %v2750 = vadd.f32 %v2749, %v2553
    %v2751 = vadd.f32 %v2750, %v2555
    %v2752 = vadd.f32 %v2751, %v2558
    %v2753 = vadd.f32 %v2752, %v2560
    %v2754 = vadd.f32 %v2753, %v2563
    %v2755 = vadd.f32 %v2754, %v2565
    %v2756 = vadd.f32 %v2755, %v2568
    %v2757 = vadd.f32 %v2756, %v2570
    %v2758 = vadd.f32 %v2757, %v2573
    %v2759 = vadd.f32 %v2758, %v2575
    %v2760 = vadd.f32 %v2759, %v2578
    %v2761 = vadd.f32 %v2760, %v2580
    %v2762 = vadd.f32 %v2761, %v2583
    %v2763 = vadd.f32 %v2762, %v2585
    %v2764 = vadd.f32 %v2763, %v2588
    %v2765 = vadd.f32 %v2764, %v2590
    %v2766 = vadd.f32 %v2765, %v2593
    %v2767 = vadd.f32 %v2766, %v2595
    %v2768 = vadd.f32 %v2767, %v2598
    %v2769 = vadd.f32 %v2768, %v2600
    %v2770 = vadd.f32 %v2769, %v2603
    %v2771 = vadd.f32 %v2770, %v2605
    %v2772 = vadd.f32 %v2771, %v2608
    %v2773 = vadd.f32 %v2772, %v2610
    %v2774 = vadd.f32 %v2773, %v2613
    %v2775 = vadd.f32 %v2774, %v2615
    %v2776 = vadd.f32 %v2775, %v2618
    %v2777 = vadd.f32 %v2776, %v2620
    %v2778 = vadd.f32 %v2777, %v2623
    %v2779 = vadd.f32 %v2778, %v2625
    %v2780 = vadd.f32 %v2779, %v2628
    %v2781 = vadd.f32 %v2780, %v2630
    %v2782 = vadd.f32 %v2781, %v2633
    %v2783 = vadd.f32 %v2782, %v2635
    %v2784 = vadd.f32 %v2783, %v2638
    %v2785 = vadd.f32 %v2784, %v2640
    %v2786 = vadd.f32 %v2785, %v2643
    %v2787 = vadd.f32 %v2786, %v2645
    %v2788 = vadd.f32 %v2787, %v2648
    %v2789 = vadd.f32 %v2788, %v2650
    %v2790 = vadd.f32 %v2789, %v2653
    %v2791 = vadd.f32 %v2790, %v2655
    %v2792 = vadd.f32 %v2791, %v2658
    %v2793 = vadd.f32 %v2792, %v2660
    %v2794 = vadd.f32 %v2793, %v2663
    %v2795 = vadd.f32 %v2794, %v2665
    %v2796 = vadd.f32 %v2795, %v2668
    %v2797 = vadd.f32 %v2796, %v2670
    %v2798 = vrot.slane %v2797, 4
    %v2799 = vadd.f32 %v2797, %v2798
    %v2800 = vrot.slane %v2799, 2
    %v2801 = vadd.f32 %v2799, %v2800
    %v2802 = vrot.slane %v2801, 1
    %v2803 = vadd.f32 %v2801, %v2802
    %v2804 = vmul.f32 %v2803, %v2221
    %v2805 = vadd.f32 %v2804, 1e-05
    %v2806 = vrsqrt.pop %v2805
    %v2807 = vld [vmem:[%s2] sm:$0x1]
    %v2808 = vmul.f32 %v2806, %v2807
    %v2809 = vlaneseq
    %v2810 = vshrl.u32 %v2809, 7
    %v2811 = vsub.s32 0, %v2810
    %v2812 = vrot.slane %v2808, %v2811
    %v2813 = vmul.f32 %v2223, %v2812
    %v2814 = vmul.f32 %v2224, %v2812
    %v2815 = vmul.f32 %v2225, %v2812
    %v2816 = vmul.f32 %v2226, %v2812
    %v2817 = vmul.f32 %v2227, %v2812
    %v2818 = vmul.f32 %v2228, %v2812
    %v2819 = vmul.f32 %v2229, %v2812
    %v2820 = vmul.f32 %v2230, %v2812
    %v2821 = vmul.f32 %v2231, %v2812
    %v2822 = vmul.f32 %v2232, %v2812
    %v2823 = vmul.f32 %v2233, %v2812
    %v2824 = vmul.f32 %v2234, %v2812
    %v2825 = vmul.f32 %v2235, %v2812
    %v2826 = vmul.f32 %v2236, %v2812
    %v2827 = vmul.f32 %v2237, %v2812
    %v2828 = vmul.f32 %v2238, %v2812
    %v2829 = vmul.f32 %v2239, %v2812
    %v2830 = vmul.f32 %v2240, %v2812
    %v2831 = vmul.f32 %v2241, %v2812
    %v2832 = vmul.f32 %v2242, %v2812
    %v2833 = vmul.f32 %v2243, %v2812
    %v2834 = vmul.f32 %v2244, %v2812
    %v2835 = vmul.f32 %v2245, %v2812
    %v2836 = vmul.f32 %v2246, %v2812
    %v2837 = vmul.f32 %v2247, %v2812
    %v2838 = vmul.f32 %v2248, %v2812
    %v2839 = vmul.f32 %v2249, %v2812
    %v2840 = vmul.f32 %v2250, %v2812
    %v2841 = vmul.f32 %v2251, %v2812
    %v2842 = vmul.f32 %v2252, %v2812
    %v2843 = vmul.f32 %v2253, %v2812
    %v2844 = vmul.f32 %v2254, %v2812
    %v2845 = vmul.f32 %v2255, %v2812
    %v2846 = vmul.f32 %v2256, %v2812
    %v2847 = vmul.f32 %v2257, %v2812
    %v2848 = vmul.f32 %v2258, %v2812
    %v2849 = vmul.f32 %v2259, %v2812
    %v2850 = vmul.f32 %v2260, %v2812
    %v2851 = vmul.f32 %v2261, %v2812
    %v2852 = vmul.f32 %v2262, %v2812
    %v2853 = vmul.f32 %v2263, %v2812
    %v2854 = vmul.f32 %v2264, %v2812
    %v2855 = vmul.f32 %v2265, %v2812
    %v2856 = vmul.f32 %v2266, %v2812
    %v2857 = vmul.f32 %v2267, %v2812
    %v2858 = vmul.f32 %v2268, %v2812
    %v2859 = vmul.f32 %v2269, %v2812
    %v2860 = vmul.f32 %v2270, %v2812
    %v2861 = vmul.f32 %v2271, %v2812
    %v2862 = vmul.f32 %v2272, %v2812
    %v2863 = vmul.f32 %v2273, %v2812
    %v2864 = vmul.f32 %v2274, %v2812
    %v2865 = vmul.f32 %v2275, %v2812
    %v2866 = vmul.f32 %v2276, %v2812
    %v2867 = vmul.f32 %v2277, %v2812
    %v2868 = vmul.f32 %v2278, %v2812
    %v2869 = vmul.f32 %v2279, %v2812
    %v2870 = vmul.f32 %v2280, %v2812
    %v2871 = vmul.f32 %v2281, %v2812
    %v2872 = vmul.f32 %v2282, %v2812
    %v2873 = vmul.f32 %v2283, %v2812
    %v2874 = vmul.f32 %v2284, %v2812
    %v2875 = vmul.f32 %v2285, %v2812
    %v2876 = vmul.f32 %v2286, %v2812
    %v2877 = vmul.f32 %v2287, %v2812
    %v2878 = vmul.f32 %v2288, %v2812
    %v2879 = vmul.f32 %v2289, %v2812
    %v2880 = vmul.f32 %v2290, %v2812
    %v2881 = vmul.f32 %v2291, %v2812
    %v2882 = vmul.f32 %v2292, %v2812
    %v2883 = vmul.f32 %v2293, %v2812
    %v2884 = vmul.f32 %v2294, %v2812
    %v2885 = vmul.f32 %v2295, %v2812
    %v2886 = vmul.f32 %v2296, %v2812
    %v2887 = vmul.f32 %v2297, %v2812
    %v2888 = vmul.f32 %v2298, %v2812
    %v2889 = vmul.f32 %v2299, %v2812
    %v2890 = vmul.f32 %v2300, %v2812
    %v2891 = vmul.f32 %v2301, %v2812
    %v2892 = vmul.f32 %v2302, %v2812
    %v2893 = vmul.f32 %v2303, %v2812
    %v2894 = vmul.f32 %v2304, %v2812
    %v2895 = vmul.f32 %v2305, %v2812
    %v2896 = vmul.f32 %v2306, %v2812
    %v2897 = vmul.f32 %v2307, %v2812
    %v2898 = vmul.f32 %v2308, %v2812
    %v2899 = vmul.f32 %v2309, %v2812
    %v2900 = vmul.f32 %v2310, %v2812
    %v2901 = vmul.f32 %v2311, %v2812
    %v2902 = vmul.f32 %v2312, %v2812
    %v2903 = vmul.f32 %v2313, %v2812
    %v2904 = vmul.f32 %v2314, %v2812
    %v2905 = vmul.f32 %v2315, %v2812
    %v2906 = vmul.f32 %v2316, %v2812
    %v2907 = vmul.f32 %v2317, %v2812
    %v2908 = vmul.f32 %v2318, %v2812
    %v2909 = vld [vmem:[%s3] sm:$0x1]
    %v2911 = vlaneseq
    %v2912 = vshrl.u32 %v2911, 7
    %v2913 = vsub.s32 0, %v2912
    %v2914 = vrot.slane %v2909, %v2913
    %v2916 = vadd.f32 %v2813, %v2914
    %v2917 = vadd.f32 %v2814, %v2914
    %v2918 = vadd.f32 %v2815, %v2914
    %v2919 = vadd.f32 %v2816, %v2914
    %v2920 = vadd.f32 %v2817, %v2914
    %v2921 = vadd.f32 %v2818, %v2914
    %v2922 = vadd.f32 %v2819, %v2914
    %v2923 = vadd.f32 %v2820, %v2914
    %v2924 = vadd.f32 %v2821, %v2914
    %v2925 = vadd.f32 %v2822, %v2914
    %v2926 = vadd.f32 %v2823, %v2914
    %v2927 = vadd.f32 %v2824, %v2914
    %v2928 = vadd.f32 %v2825, %v2914
    %v2929 = vadd.f32 %v2826, %v2914
    %v2930 = vadd.f32 %v2827, %v2914
    %v2931 = vadd.f32 %v2828, %v2914
    %v2932 = vadd.f32 %v2829, %v2914
    %v2933 = vadd.f32 %v2830, %v2914
    %v2934 = vadd.f32 %v2831, %v2914
    %v2935 = vadd.f32 %v2832, %v2914
    %v2936 = vadd.f32 %v2833, %v2914
    %v2937 = vadd.f32 %v2834, %v2914
    %v2938 = vadd.f32 %v2835, %v2914
    %v2939 = vadd.f32 %v2836, %v2914
    %v2940 = vadd.f32 %v2837, %v2914
    %v2941 = vadd.f32 %v2838, %v2914
    %v2942 = vadd.f32 %v2839, %v2914
    %v2943 = vadd.f32 %v2840, %v2914
    %v2944 = vadd.f32 %v2841, %v2914
    %v2945 = vadd.f32 %v2842, %v2914
    %v2946 = vadd.f32 %v2843, %v2914
    %v2947 = vadd.f32 %v2844, %v2914
    %v2948 = vadd.f32 %v2845, %v2914
    %v2949 = vadd.f32 %v2846, %v2914
    %v2950 = vadd.f32 %v2847, %v2914
    %v2951 = vadd.f32 %v2848, %v2914
    %v2952 = vadd.f32 %v2849, %v2914
    %v2953 = vadd.f32 %v2850, %v2914
    %v2954 = vadd.f32 %v2851, %v2914
    %v2955 = vadd.f32 %v2852, %v2914
    %v2956 = vadd.f32 %v2853, %v2914
    %v2957 = vadd.f32 %v2854, %v2914
    %v2958 = vadd.f32 %v2855, %v2914
    %v2959 = vadd.f32 %v2856, %v2914
    %v2960 = vadd.f32 %v2857, %v2914
    %v2961 = vadd.f32 %v2858, %v2914
    %v2962 = vadd.f32 %v2859, %v2914
    %v2963 = vadd.f32 %v2860, %v2914
    %v2964 = vadd.f32 %v2861, %v2914
    %v2965 = vadd.f32 %v2862, %v2914
    %v2966 = vadd.f32 %v2863, %v2914
    %v2967 = vadd.f32 %v2864, %v2914
    %v2968 = vadd.f32 %v2865, %v2914
    %v2969 = vadd.f32 %v2866, %v2914
    %v2970 = vadd.f32 %v2867, %v2914
    %v2971 = vadd.f32 %v2868, %v2914
    %v2972 = vadd.f32 %v2869, %v2914
    %v2973 = vadd.f32 %v2870, %v2914
    %v2974 = vadd.f32 %v2871, %v2914
    %v2975 = vadd.f32 %v2872, %v2914
    %v2976 = vadd.f32 %v2873, %v2914
    %v2977 = vadd.f32 %v2874, %v2914
    %v2978 = vadd.f32 %v2875, %v2914
    %v2979 = vadd.f32 %v2876, %v2914
    %v2980 = vadd.f32 %v2877, %v2914
    %v2981 = vadd.f32 %v2878, %v2914
    %v2982 = vadd.f32 %v2879, %v2914
    %v2983 = vadd.f32 %v2880, %v2914
    %v2984 = vadd.f32 %v2881, %v2914
    %v2985 = vadd.f32 %v2882, %v2914
    %v2986 = vadd.f32 %v2883, %v2914
    %v2987 = vadd.f32 %v2884, %v2914
    %v2988 = vadd.f32 %v2885, %v2914
    %v2989 = vadd.f32 %v2886, %v2914
    %v2990 = vadd.f32 %v2887, %v2914
    %v2991 = vadd.f32 %v2888, %v2914
    %v2992 = vadd.f32 %v2889, %v2914
    %v2993 = vadd.f32 %v2890, %v2914
    %v2994 = vadd.f32 %v2891, %v2914
    %v2995 = vadd.f32 %v2892, %v2914
    %v2996 = vadd.f32 %v2893, %v2914
    %v2997 = vadd.f32 %v2894, %v2914
    %v2998 = vadd.f32 %v2895, %v2914
    %v2999 = vadd.f32 %v2896, %v2914
    %v3000 = vadd.f32 %v2897, %v2914
    %v3001 = vadd.f32 %v2898, %v2914
    %v3002 = vadd.f32 %v2899, %v2914
    %v3003 = vadd.f32 %v2900, %v2914
    %v3004 = vadd.f32 %v2901, %v2914
    %v3005 = vadd.f32 %v2902, %v2914
    %v3006 = vadd.f32 %v2903, %v2914
    %v3007 = vadd.f32 %v2904, %v2914
    %v3008 = vadd.f32 %v2905, %v2914
    %v3009 = vadd.f32 %v2906, %v2914
    %v3010 = vadd.f32 %v2907, %v2914
    %v3011 = vadd.f32 %v2908, %v2914
    %v3108 = vrot.slane %v2916, 7
    %v3109 = vrot.slane %v2917, 7
    %v3110 = vsel %vm1927, %v3108, %v3109
    %v3111 = vrot.slane %v2918, 7
    %v3112 = vsel %vm1927, %v3109, %v3111
    %v3113 = vrot.slane %v2919, 7
    %v3114 = vrot.slane %v2920, 7
    %v3115 = vsel %vm1927, %v3113, %v3114
    %v3116 = vrot.slane %v2921, 7
    %v3117 = vsel %vm1927, %v3114, %v3116
    %v3118 = vrot.slane %v2922, 7
    %v3119 = vrot.slane %v2923, 7
    %v3120 = vsel %vm1927, %v3118, %v3119
    %v3121 = vrot.slane %v2924, 7
    %v3122 = vsel %vm1927, %v3119, %v3121
    %v3123 = vrot.slane %v2925, 7
    %v3124 = vrot.slane %v2926, 7
    %v3125 = vsel %vm1927, %v3123, %v3124
    %v3126 = vrot.slane %v2927, 7
    %v3127 = vsel %vm1927, %v3124, %v3126
    %v3128 = vrot.slane %v2928, 7
    %v3129 = vrot.slane %v2929, 7
    %v3130 = vsel %vm1927, %v3128, %v3129
    %v3131 = vrot.slane %v2930, 7
    %v3132 = vsel %vm1927, %v3129, %v3131
    %v3133 = vrot.slane %v2931, 7
    %v3134 = vrot.slane %v2932, 7
    %v3135 = vsel %vm1927, %v3133, %v3134
    %v3136 = vrot.slane %v2933, 7
    %v3137 = vsel %vm1927, %v3134, %v3136
    %v3138 = vrot.slane %v2934, 7
    %v3139 = vrot.slane %v2935, 7
    %v3140 = vsel %vm1927, %v3138, %v3139
    %v3141 = vrot.slane %v2936, 7
    %v3142 = vsel %vm1927, %v3139, %v3141
    %v3143 = vrot.slane %v2937, 7
    %v3144 = vrot.slane %v2938, 7
    %v3145 = vsel %vm1927, %v3143, %v3144
    %v3146 = vrot.slane %v2939, 7
    %v3147 = vsel %vm1927, %v3144, %v3146
    %v3148 = vrot.slane %v2940, 7
    %v3149 = vrot.slane %v2941, 7
    %v3150 = vsel %vm1927, %v3148, %v3149
    %v3151 = vrot.slane %v2942, 7
    %v3152 = vsel %vm1927, %v3149, %v3151
    %v3153 = vrot.slane %v2943, 7
    %v3154 = vrot.slane %v2944, 7
    %v3155 = vsel %vm1927, %v3153, %v3154
    %v3156 = vrot.slane %v2945, 7
    %v3157 = vsel %vm1927, %v3154, %v3156
    %v3158 = vrot.slane %v2946, 7
    %v3159 = vrot.slane %v2947, 7
    %v3160 = vsel %vm1927, %v3158, %v3159
    %v3161 = vrot.slane %v2948, 7
    %v3162 = vsel %vm1927, %v3159, %v3161
    %v3163 = vrot.slane %v2949, 7
    %v3164 = vrot.slane %v2950, 7
    %v3165 = vsel %vm1927, %v3163, %v3164
    %v3166 = vrot.slane %v2951, 7
    %v3167 = vsel %vm1927, %v3164, %v3166
    %v3168 = vrot.slane %v2952, 7
    %v3169 = vrot.slane %v2953, 7
    %v3170 = vsel %vm1927, %v3168, %v3169
    %v3171 = vrot.slane %v2954, 7
    %v3172 = vsel %vm1927, %v3169, %v3171
    %v3173 = vrot.slane %v2955, 7
    %v3174 = vrot.slane %v2956, 7
    %v3175 = vsel %vm1927, %v3173, %v3174
    %v3176 = vrot.slane %v2957, 7
    %v3177 = vsel %vm1927, %v3174, %v3176
    %v3178 = vrot.slane %v2958, 7
    %v3179 = vrot.slane %v2959, 7
    %v3180 = vsel %vm1927, %v3178, %v3179
    %v3181 = vrot.slane %v2960, 7
    %v3182 = vsel %vm1927, %v3179, %v3181
    %v3183 = vrot.slane %v2961, 7
    %v3184 = vrot.slane %v2962, 7
    %v3185 = vsel %vm1927, %v3183, %v3184
    %v3186 = vrot.slane %v2963, 7
    %v3187 = vsel %vm1927, %v3184, %v3186
    %v3188 = vrot.slane %v2964, 7
    %v3189 = vrot.slane %v2965, 7
    %v3190 = vsel %vm1927, %v3188, %v3189
    %v3191 = vrot.slane %v2966, 7
    %v3192 = vsel %vm1927, %v3189, %v3191
    %v3193 = vrot.slane %v2967, 7
    %v3194 = vrot.slane %v2968, 7
    %v3195 = vsel %vm1927, %v3193, %v3194
    %v3196 = vrot.slane %v2969, 7
    %v3197 = vsel %vm1927, %v3194, %v3196
    %v3198 = vrot.slane %v2970, 7
    %v3199 = vrot.slane %v2971, 7
    %v3200 = vsel %vm1927, %v3198, %v3199
    %v3201 = vrot.slane %v2972, 7
    %v3202 = vsel %vm1927, %v3199, %v3201
    %v3203 = vrot.slane %v2973, 7
    %v3204 = vrot.slane %v2974, 7
    %v3205 = vsel %vm1927, %v3203, %v3204
    %v3206 = vrot.slane %v2975, 7
    %v3207 = vsel %vm1927, %v3204, %v3206
    %v3208 = vrot.slane %v2976, 7
    %v3209 = vrot.slane %v2977, 7
    %v3210 = vsel %vm1927, %v3208, %v3209
    %v3211 = vrot.slane %v2978, 7
    %v3212 = vsel %vm1927, %v3209, %v3211
    %v3213 = vrot.slane %v2979, 7
    %v3214 = vrot.slane %v2980, 7
    %v3215 = vsel %vm1927, %v3213, %v3214
    %v3216 = vrot.slane %v2981, 7
    %v3217 = vsel %vm1927, %v3214, %v3216
    %v3218 = vrot.slane %v2982, 7
    %v3219 = vrot.slane %v2983, 7
    %v3220 = vsel %vm1927, %v3218, %v3219
    %v3221 = vrot.slane %v2984, 7
    %v3222 = vsel %vm1927, %v3219, %v3221
    %v3223 = vrot.slane %v2985, 7
    %v3224 = vrot.slane %v2986, 7
    %v3225 = vsel %vm1927, %v3223, %v3224
    %v3226 = vrot.slane %v2987, 7
    %v3227 = vsel %vm1927, %v3224, %v3226
    %v3228 = vrot.slane %v2988, 7
    %v3229 = vrot.slane %v2989, 7
    %v3230 = vsel %vm1927, %v3228, %v3229
    %v3231 = vrot.slane %v2990, 7
    %v3232 = vsel %vm1927, %v3229, %v3231
    %v3233 = vrot.slane %v2991, 7
    %v3234 = vrot.slane %v2992, 7
    %v3235 = vsel %vm1927, %v3233, %v3234
    %v3236 = vrot.slane %v2993, 7
    %v3237 = vsel %vm1927, %v3234, %v3236
    %v3238 = vrot.slane %v2994, 7
    %v3239 = vrot.slane %v2995, 7
    %v3240 = vsel %vm1927, %v3238, %v3239
    %v3241 = vrot.slane %v2996, 7
    %v3242 = vsel %vm1927, %v3239, %v3241
    %v3243 = vrot.slane %v2997, 7
    %v3244 = vrot.slane %v2998, 7
    %v3245 = vsel %vm1927, %v3243, %v3244
    %v3246 = vrot.slane %v2999, 7
    %v3247 = vsel %vm1927, %v3244, %v3246
    %v3248 = vrot.slane %v3000, 7
    %v3249 = vrot.slane %v3001, 7
    %v3250 = vsel %vm1927, %v3248, %v3249
    %v3251 = vrot.slane %v3002, 7
    %v3252 = vsel %vm1927, %v3249, %v3251
    %v3253 = vrot.slane %v3003, 7
    %v3254 = vrot.slane %v3004, 7
    %v3255 = vsel %vm1927, %v3253, %v3254
    %v3256 = vrot.slane %v3005, 7
    %v3257 = vsel %vm1927, %v3254, %v3256
    %v3258 = vrot.slane %v3006, 7
    %v3259 = vrot.slane %v3007, 7
    %v3260 = vsel %vm1927, %v3258, %v3259
    %v3261 = vrot.slane %v3008, 7
    %v3262 = vsel %vm1927, %v3259, %v3261
    %v3263 = vrot.slane %v3009, 7
    %v3264 = vrot.slane %v3010, 7
    %v3265 = vsel %vm1927, %v3263, %v3264
    %v3266 = vrot.slane %v3011, 7
    %v3267 = vsel %vm1927, %v3264, %v3266
    %v3332 = vmax.f32 %v46, %v3110
    %v3333 = vmax.f32 %v47, %v3112
    %v3334 = vmax.f32 %v48, %v3115
    %v3335 = vmax.f32 %v49, %v3117
    %v3336 = vmax.f32 %v50, %v3120
    %v3337 = vmax.f32 %v51, %v3122
    %v3338 = vmax.f32 %v52, %v3125
    %v3339 = vmax.f32 %v53, %v3127
    %v3340 = vmax.f32 %v54, %v3130
    %v3341 = vmax.f32 %v55, %v3132
    %v3342 = vmax.f32 %v56, %v3135
    %v3343 = vmax.f32 %v57, %v3137
    %v3344 = vmax.f32 %v58, %v3140
    %v3345 = vmax.f32 %v59, %v3142
    %v3346 = vmax.f32 %v60, %v3145
    %v3347 = vmax.f32 %v61, %v3147
    %v3348 = vmax.f32 %v62, %v3150
    %v3349 = vmax.f32 %v63, %v3152
    %v3350 = vmax.f32 %v64, %v3155
    %v3351 = vmax.f32 %v65, %v3157
    %v3352 = vmax.f32 %v66, %v3160
    %v3353 = vmax.f32 %v67, %v3162
    %v3354 = vmax.f32 %v68, %v3165
    %v3355 = vmax.f32 %v69, %v3167
    %v3356 = vmax.f32 %v70, %v3170
    %v3357 = vmax.f32 %v71, %v3172
    %v3358 = vmax.f32 %v72, %v3175
    %v3359 = vmax.f32 %v73, %v3177
    %v3360 = vmax.f32 %v74, %v3180
    %v3361 = vmax.f32 %v75, %v3182
    %v3362 = vmax.f32 %v76, %v3185
    %v3363 = vmax.f32 %v77, %v3187
    %v3364 = vmax.f32 %v78, %v3190
    %v3365 = vmax.f32 %v79, %v3192
    %v3366 = vmax.f32 %v80, %v3195
    %v3367 = vmax.f32 %v81, %v3197
    %v3368 = vmax.f32 %v82, %v3200
    %v3369 = vmax.f32 %v83, %v3202
    %v3370 = vmax.f32 %v84, %v3205
    %v3371 = vmax.f32 %v85, %v3207
    %v3372 = vmax.f32 %v86, %v3210
    %v3373 = vmax.f32 %v87, %v3212
    %v3374 = vmax.f32 %v88, %v3215
    %v3375 = vmax.f32 %v89, %v3217
    %v3376 = vmax.f32 %v90, %v3220
    %v3377 = vmax.f32 %v91, %v3222
    %v3378 = vmax.f32 %v92, %v3225
    %v3379 = vmax.f32 %v93, %v3227
    %v3380 = vmax.f32 %v94, %v3230
    %v3381 = vmax.f32 %v95, %v3232
    %v3382 = vmax.f32 %v96, %v3235
    %v3383 = vmax.f32 %v97, %v3237
    %v3384 = vmax.f32 %v98, %v3240
    %v3385 = vmax.f32 %v99, %v3242
    %v3386 = vmax.f32 %v100, %v3245
    %v3387 = vmax.f32 %v101, %v3247
    %v3388 = vmax.f32 %v102, %v3250
    %v3389 = vmax.f32 %v103, %v3252
    %v3390 = vmax.f32 %v104, %v3255
    %v3391 = vmax.f32 %v105, %v3257
    %v3392 = vmax.f32 %v106, %v3260
    %v3393 = vmax.f32 %v107, %v3262
    %v3394 = vmax.f32 %v108, %v3265
    %v3395 = vmax.f32 %v109, %v3267
    %3396 = vst [vmem:[#allocation7] sm:$0xff] %v3332
    %3397 = vst [vmem:[#allocation7 + $0x8] sm:$0xff] %v3333
    %3398 = vst [vmem:[#allocation7 + $0x10] sm:$0xff] %v3334
    %3399 = vst [vmem:[#allocation7 + $0x18] sm:$0xff] %v3335
    %3400 = vst [vmem:[#allocation7 + $0x20] sm:$0xff] %v3336
    %3401 = vst [vmem:[#allocation7 + $0x28] sm:$0xff] %v3337
    %3402 = vst [vmem:[#allocation7 + $0x30] sm:$0xff] %v3338
    %3403 = vst [vmem:[#allocation7 + $0x38] sm:$0xff] %v3339
    %3404 = vst [vmem:[#allocation7 + $0x40] sm:$0xff] %v3340
    %3405 = vst [vmem:[#allocation7 + $0x48] sm:$0xff] %v3341
    %3406 = vst [vmem:[#allocation7 + $0x50] sm:$0xff] %v3342
    %3407 = vst [vmem:[#allocation7 + $0x58] sm:$0xff] %v3343
    %3408 = vst [vmem:[#allocation7 + $0x60] sm:$0xff] %v3344
    %3409 = vst [vmem:[#allocation7 + $0x68] sm:$0xff] %v3345
    %3410 = vst [vmem:[#allocation7 + $0x70] sm:$0xff] %v3346
    %3411 = vst [vmem:[#allocation7 + $0x78] sm:$0xff] %v3347
    %3412 = vst [vmem:[#allocation7 + $0x80] sm:$0xff] %v3348
    %3413 = vst [vmem:[#allocation7 + $0x88] sm:$0xff] %v3349
    %3414 = vst [vmem:[#allocation7 + $0x90] sm:$0xff] %v3350
    %3415 = vst [vmem:[#allocation7 + $0x98] sm:$0xff] %v3351
    %3416 = vst [vmem:[#allocation7 + $0xa0] sm:$0xff] %v3352
    %3417 = vst [vmem:[#allocation7 + $0xa8] sm:$0xff] %v3353
    %3418 = vst [vmem:[#allocation7 + $0xb0] sm:$0xff] %v3354
    %3419 = vst [vmem:[#allocation7 + $0xb8] sm:$0xff] %v3355
    %3420 = vst [vmem:[#allocation7 + $0xc0] sm:$0xff] %v3356
    %3421 = vst [vmem:[#allocation7 + $0xc8] sm:$0xff] %v3357
    %3422 = vst [vmem:[#allocation7 + $0xd0] sm:$0xff] %v3358
    %3423 = vst [vmem:[#allocation7 + $0xd8] sm:$0xff] %v3359
    %3424 = vst [vmem:[#allocation7 + $0xe0] sm:$0xff] %v3360
    %3425 = vst [vmem:[#allocation7 + $0xe8] sm:$0xff] %v3361
    %3426 = vst [vmem:[#allocation7 + $0xf0] sm:$0xff] %v3362
    %3427 = vst [vmem:[#allocation7 + $0xf8] sm:$0xff] %v3363
    %3428 = vst [vmem:[#allocation7 + $0x100] sm:$0xff] %v3364
    %3429 = vst [vmem:[#allocation7 + $0x108] sm:$0xff] %v3365
    %3430 = vst [vmem:[#allocation7 + $0x110] sm:$0xff] %v3366
    %3431 = vst [vmem:[#allocation7 + $0x118] sm:$0xff] %v3367
    %3432 = vst [vmem:[#allocation7 + $0x120] sm:$0xff] %v3368
    %3433 = vst [vmem:[#allocation7 + $0x128] sm:$0xff] %v3369
    %3434 = vst [vmem:[#allocation7 + $0x130] sm:$0xff] %v3370
    %3435 = vst [vmem:[#allocation7 + $0x138] sm:$0xff] %v3371
    %3436 = vst [vmem:[#allocation7 + $0x140] sm:$0xff] %v3372
    %3437 = vst [vmem:[#allocation7 + $0x148] sm:$0xff] %v3373
    %3438 = vst [vmem:[#allocation7 + $0x150] sm:$0xff] %v3374
    %3439 = vst [vmem:[#allocation7 + $0x158] sm:$0xff] %v3375
    %3440 = vst [vmem:[#allocation7 + $0x160] sm:$0xff] %v3376
    %3441 = vst [vmem:[#allocation7 + $0x168] sm:$0xff] %v3377
    %3442 = vst [vmem:[#allocation7 + $0x170] sm:$0xff] %v3378
    %3443 = vst [vmem:[#allocation7 + $0x178] sm:$0xff] %v3379
    %3444 = vst [vmem:[#allocation7 + $0x180] sm:$0xff] %v3380
    %3445 = vst [vmem:[#allocation7 + $0x188] sm:$0xff] %v3381
    %3446 = vst [vmem:[#allocation7 + $0x190] sm:$0xff] %v3382
    %3447 = vst [vmem:[#allocation7 + $0x198] sm:$0xff] %v3383
    %3448 = vst [vmem:[#allocation7 + $0x1a0] sm:$0xff] %v3384
    %3449 = vst [vmem:[#allocation7 + $0x1a8] sm:$0xff] %v3385
    %3450 = vst [vmem:[#allocation7 + $0x1b0] sm:$0xff] %v3386
    %3451 = vst [vmem:[#allocation7 + $0x1b8] sm:$0xff] %v3387
    %3452 = vst [vmem:[#allocation7 + $0x1c0] sm:$0xff] %v3388
    %3453 = vst [vmem:[#allocation7 + $0x1c8] sm:$0xff] %v3389
    %3454 = vst [vmem:[#allocation7 + $0x1d0] sm:$0xff] %v3390
    %3455 = vst [vmem:[#allocation7 + $0x1d8] sm:$0xff] %v3391
    %3456 = vst [vmem:[#allocation7 + $0x1e0] sm:$0xff] %v3392
    %3457 = vst [vmem:[#allocation7 + $0x1e8] sm:$0xff] %v3393
    %3458 = vst [vmem:[#allocation7 + $0x1f0] sm:$0xff] %v3394
    %3459 = vst [vmem:[#allocation7 + $0x1f8] sm:$0xff] %v3395
    // Predicated region
    $region26: #{tpu_custom_call.1} parent=1 // pred_check
      _
    $region27: #{tpu_custom_call.1} parent=1 // pred_check_branch
      %3461 = sbr.rel (0) target = $region29
    $region28: #{tpu_custom_call.1} parent=1 // pred_region
      %s3463 = ssub.s32 8192, 8192
      %3464 = vsyncadd [#allocation4], %s3463
      %s3465 = sshll.u32 [#allocation7], 4
      %s3466 = int_to_ptr.vmem [resolvable:$true] %s3465
      %3471 = dma.vmem_to_hbm [thread:$0]  %s3466, 8192, %s4, [#allocation4], 128, 128, 8
    $region29: #{tpu_custom_call.1} parent=1 // pred_fallthru
      _
    // Predicated region
    $region30: #{tpu_custom_call.1} parent=1 // pred_check
      _
    $region31: #{tpu_custom_call.1} parent=1 // pred_check_branch
      %3473 = sbr.rel (0) target = $region33
    $region32: #{tpu_custom_call.1} parent=1 // pred_region
      %3474 = dma.done [#allocation4], 8192
    $region33: #{tpu_custom_call.1} parent=1 // pred_fallthru
      _
    %3475 = vsyncpa [#allocation3], 1
    %3476 = vsyncpa [#allocation6], 1
    %3477 = vsyncpa [#allocation4], 1

</llo_original>
